<compile_context>
chip_gen: v7x
topology: tpu7x:2x2x1
jax: 0.10.0
libtpu: 0.0.40
codegen_flags: <defaults>
</compile_context>

<pallas_src>
import jax
import jax.numpy as jnp
from jax import lax
from jax.experimental import pallas as pl
from jax.experimental.pallas import tpu as pltpu


def _make_kernel(Nb, C_in, C_out, H, W, KH, KW):
    Ho = H - KH + 1
    Wo = W - KW + 1

    def kernel(x_ref, wdw_ref, wpw_ref, o_ref):
        # x_ref:   (Nb, C_in, H, W)    VMEM input batch tile (native NCHW)
        # wdw_ref: (C_in*KH*KW,)       SMEM depthwise taps, row-major (ci,kh,kw)
        # wpw_ref: (C_out*C_in,)       SMEM pointwise weights, row-major (co,ci)
        # o_ref:   (Nb, C_out, Ho, Wo) VMEM output batch tile (native NCHW)
        for n in range(Nb):                      # static unroll (Nb kept small)
            # ---- depthwise KxK correlation: one (H, W) plane per channel ----
            dw = []
            for ci in range(C_in):
                xc = x_ref[n, ci, :, :].astype(jnp.float32)        # (H, W)
                acc = jnp.zeros((Ho, Wo), jnp.float32)
                for kh in range(KH):
                    xr = xc[kh:kh + Ho, :]                         # row-shifted
                    for kw in range(KW):
                        w = wdw_ref[ci * KH * KW + kh * KW + kw]   # SMEM scalar
                        acc = acc + xr[:, kw:kw + Wo] * w          # VPU MAC
                dw.append(acc)
            # ---- pointwise 1x1: channel mixing as scalar broadcast-MACs ----
            for co in range(C_out):
                out = dw[0] * wpw_ref[co * C_in]
                for ci in range(1, C_in):
                    out = out + dw[ci] * wpw_ref[co * C_in + ci]
                o_ref[n, co, :, :] = out.astype(o_ref.dtype)

    return kernel


def _pick_batch_tile(N, bytes_per_image, max_unroll=8,
                     vmem_budget_bytes=12 * 1024 * 1024):
    """Largest divisor of N whose per-step in+out footprint fits the budget."""
    nb = max(1, min(N, max_unroll, vmem_budget_bytes // max(bytes_per_image, 1)))
    while N % nb:
        nb -= 1
    return nb


def depthwise_separable_conv2d(x_nchw, w_dw, w_pw):
    """x_nchw: (N, C_in, H, W); w_dw: (C_in, 1, KH, KW); w_pw: (C_out, C_in, 1, 1)."""
    N, C_in, H, W = x_nchw.shape
    KH, KW = int(w_dw.shape[2]), int(w_dw.shape[3])
    C_out = int(w_pw.shape[0])
    Ho, Wo = H - KH + 1, W - KW + 1

    itemsize = jnp.dtype(x_nchw.dtype).itemsize
    bytes_per_image = (C_in * H * W + C_out * Ho * Wo) * itemsize
    Nb = _pick_batch_tile(N, bytes_per_image)

    # Flattened f32 weights for SMEM scalar reads.
    wdw_flat = w_dw[:, 0, :, :].reshape(C_in * KH * KW).astype(jnp.float32)
    wpw_flat = w_pw[:, :, 0, 0].reshape(C_out * C_in).astype(jnp.float32)

    kernel = _make_kernel(Nb, C_in, C_out, H, W, KH, KW)

    out = pl.pallas_call(
        kernel,
        out_shape=jax.ShapeDtypeStruct((N, C_out, Ho, Wo), x_nchw.dtype),
        grid_spec=pltpu.PrefetchScalarGridSpec(
            num_scalar_prefetch=0,
            grid=(N // Nb,),
            in_specs=[
                pl.BlockSpec((Nb, C_in, H, W), lambda b: (b, 0, 0, 0)),
                pl.BlockSpec(memory_space=pltpu.MemorySpace.SMEM),
                pl.BlockSpec(memory_space=pltpu.MemorySpace.SMEM),
            ],
            out_specs=pl.BlockSpec((Nb, C_out, Ho, Wo), lambda b: (b, 0, 0, 0)),
        ),
        compiler_params=pltpu.CompilerParams(
            dimension_semantics=("parallel",),
            vmem_limit_bytes=32 * 1024 * 1024,
        ),
    )(x_nchw, wdw_flat, wpw_flat)
    return out


def _reference(x_nchw, w_dw, w_pw):
    """Pure-JAX reference matching PyTorch Conv2d semantics (stride 1, no pad)."""
    C_in = x_nchw.shape[1]
    dw = lax.conv_general_dilated(
        x_nchw, w_dw, window_strides=(1, 1), padding="VALID",
        dimension_numbers=("NCHW", "OIHW", "NCHW"),
        feature_group_count=C_in)
    pw = lax.conv_general_dilated(
        dw, w_pw, window_strides=(1, 1), padding="VALID",
        dimension_numbers=("NCHW", "OIHW", "NCHW"))
    return pw


if __name__ == "__main__":
    # Module config (synthetic, deterministic init)
    N, C_in, H, W = 2, 4, 16, 16
    C_out, K = 8, 3

    key = jax.random.PRNGKey(0)
    kx, kdw, kpw = jax.random.split(key, 3)
    x = jax.random.normal(kx, (N, C_in, H, W), dtype=jnp.float32)
    # PyTorch weight shapes: depthwise (C_in, 1, K, K), pointwise (C_out, C_in, 1, 1)
    w_dw = jax.random.normal(kdw, (C_in, 1, K, K), dtype=jnp.float32) * 0.1
    w_pw = jax.random.normal(kpw, (C_out, C_in, 1, 1), dtype=jnp.float32) * 0.1

    out = depthwise_separable_conv2d(x, w_dw, w_pw)
    out = jax.block_until_ready(out)

    ref = jax.block_until_ready(_reference(x, w_dw, w_pw))
    assert out.shape == ref.shape == (N, C_out, H - K + 1, W - K + 1)
    assert jnp.allclose(out, ref, rtol=1e-4, atol=1e-4), "mismatch vs reference"

    print("KERNEL_OK")
</pallas_src>

<mosaic_0001>
module attributes {stable_mosaic.version = 11 : i64} {
  func.func @kernel(%arg0: i32, %arg1: memref<2x4x16x16xf32, #tpu.memory_space<vmem>>, %arg2: memref<36xf32, #tpu.memory_space<smem>>, %arg3: memref<32xf32, #tpu.memory_space<smem>>, %arg4: memref<2x8x14x14xf32, #tpu.memory_space<vmem>>) attributes {dimension_semantics = [#tpu.dimension_semantics<parallel>], iteration_bounds = array<i64: 1>, scalar_prefetch = 0 : i64, scratch_operands = 0 : i64, tpu.core_type = #tpu.core_type<tc>, window_params = [{transform_indices = @transform_0, window_bounds = array<i64: 2, 4, 16, 16>}, {transform_indices = @transform_1, window_bounds = array<i64: 36>}, {transform_indices = @transform_2, window_bounds = array<i64: 32>}, {transform_indices = @transform_3, window_bounds = array<i64: 2, 8, 14, 14>}]} {
    %c0 = arith.constant 0 : index
    %c0_0 = arith.constant 0 : index
    %c0_1 = arith.constant 0 : index
    %c0_2 = arith.constant 0 : index
    %0 = vector.load %arg1[%c0, %c0_0, %c0_1, %c0_2] : memref<2x4x16x16xf32, #tpu.memory_space<vmem>>, vector<1x1x16x16xf32>
    %1 = vector.shape_cast %0 : vector<1x1x16x16xf32> to vector<16x16xf32>
    %cst = arith.constant 0.000000e+00 : f32
    %2 = vector.broadcast %cst : f32 to vector<14x14xf32>
    %3 = vector.extract_strided_slice %1 {offsets = [0, 0], sizes = [14, 16], strides = [1, 1]} : vector<16x16xf32> to vector<14x16xf32>
    %c0_3 = arith.constant 0 : index
    %4 = memref.load %arg2[%c0_3] : memref<36xf32, #tpu.memory_space<smem>>
    %5 = vector.extract_strided_slice %3 {offsets = [0, 0], sizes = [14, 14], strides = [1, 1]} : vector<14x16xf32> to vector<14x14xf32>
    %6 = vector.broadcast %4 : f32 to vector<14x14xf32>
    %7 = arith.mulf %5, %6 : vector<14x14xf32>
    %8 = arith.addf %2, %7 : vector<14x14xf32>
    %c1 = arith.constant 1 : index
    %9 = memref.load %arg2[%c1] : memref<36xf32, #tpu.memory_space<smem>>
    %10 = vector.extract_strided_slice %3 {offsets = [0, 1], sizes = [14, 14], strides = [1, 1]} : vector<14x16xf32> to vector<14x14xf32>
    %11 = vector.broadcast %9 : f32 to vector<14x14xf32>
    %12 = arith.mulf %10, %11 : vector<14x14xf32>
    %13 = arith.addf %8, %12 : vector<14x14xf32>
    %c2 = arith.constant 2 : index
    %14 = memref.load %arg2[%c2] : memref<36xf32, #tpu.memory_space<smem>>
    %15 = vector.extract_strided_slice %3 {offsets = [0, 2], sizes = [14, 14], strides = [1, 1]} : vector<14x16xf32> to vector<14x14xf32>
    %16 = vector.broadcast %14 : f32 to vector<14x14xf32>
    %17 = arith.mulf %15, %16 : vector<14x14xf32>
    %18 = arith.addf %13, %17 : vector<14x14xf32>
    %19 = vector.extract_strided_slice %1 {offsets = [1, 0], sizes = [14, 16], strides = [1, 1]} : vector<16x16xf32> to vector<14x16xf32>
    %c3 = arith.constant 3 : index
    %20 = memref.load %arg2[%c3] : memref<36xf32, #tpu.memory_space<smem>>
    %21 = vector.extract_strided_slice %19 {offsets = [0, 0], sizes = [14, 14], strides = [1, 1]} : vector<14x16xf32> to vector<14x14xf32>
    %22 = vector.broadcast %20 : f32 to vector<14x14xf32>
    %23 = arith.mulf %21, %22 : vector<14x14xf32>
    %24 = arith.addf %18, %23 : vector<14x14xf32>
    %c4 = arith.constant 4 : index
    %25 = memref.load %arg2[%c4] : memref<36xf32, #tpu.memory_space<smem>>
    %26 = vector.extract_strided_slice %19 {offsets = [0, 1], sizes = [14, 14], strides = [1, 1]} : vector<14x16xf32> to vector<14x14xf32>
    %27 = vector.broadcast %25 : f32 to vector<14x14xf32>
    %28 = arith.mulf %26, %27 : vector<14x14xf32>
    %29 = arith.addf %24, %28 : vector<14x14xf32>
    %c5 = arith.constant 5 : index
    %30 = memref.load %arg2[%c5] : memref<36xf32, #tpu.memory_space<smem>>
    %31 = vector.extract_strided_slice %19 {offsets = [0, 2], sizes = [14, 14], strides = [1, 1]} : vector<14x16xf32> to vector<14x14xf32>
    %32 = vector.broadcast %30 : f32 to vector<14x14xf32>
    %33 = arith.mulf %31, %32 : vector<14x14xf32>
    %34 = arith.addf %29, %33 : vector<14x14xf32>
    %35 = vector.extract_strided_slice %1 {offsets = [2, 0], sizes = [14, 16], strides = [1, 1]} : vector<16x16xf32> to vector<14x16xf32>
    %c6 = arith.constant 6 : index
    %36 = memref.load %arg2[%c6] : memref<36xf32, #tpu.memory_space<smem>>
    %37 = vector.extract_strided_slice %35 {offsets = [0, 0], sizes = [14, 14], strides = [1, 1]} : vector<14x16xf32> to vector<14x14xf32>
    %38 = vector.broadcast %36 : f32 to vector<14x14xf32>
    %39 = arith.mulf %37, %38 : vector<14x14xf32>
    %40 = arith.addf %34, %39 : vector<14x14xf32>
    %c7 = arith.constant 7 : index
    %41 = memref.load %arg2[%c7] : memref<36xf32, #tpu.memory_space<smem>>
    %42 = vector.extract_strided_slice %35 {offsets = [0, 1], sizes = [14, 14], strides = [1, 1]} : vector<14x16xf32> to vector<14x14xf32>
    %43 = vector.broadcast %41 : f32 to vector<14x14xf32>
    %44 = arith.mulf %42, %43 : vector<14x14xf32>
    %45 = arith.addf %40, %44 : vector<14x14xf32>
    %c8 = arith.constant 8 : index
    %46 = memref.load %arg2[%c8] : memref<36xf32, #tpu.memory_space<smem>>
    %47 = vector.extract_strided_slice %35 {offsets = [0, 2], sizes = [14, 14], strides = [1, 1]} : vector<14x16xf32> to vector<14x14xf32>
    %48 = vector.broadcast %46 : f32 to vector<14x14xf32>
    %49 = arith.mulf %47, %48 : vector<14x14xf32>
    %50 = arith.addf %45, %49 : vector<14x14xf32>
    %c0_4 = arith.constant 0 : index
    %c1_5 = arith.constant 1 : index
    %c0_6 = arith.constant 0 : index
    %c0_7 = arith.constant 0 : index
    %51 = vector.load %arg1[%c0_4, %c1_5, %c0_6, %c0_7] : memref<2x4x16x16xf32, #tpu.memory_space<vmem>>, vector<1x1x16x16xf32>
    %52 = vector.shape_cast %51 : vector<1x1x16x16xf32> to vector<16x16xf32>
    %cst_8 = arith.constant 0.000000e+00 : f32
    %53 = vector.broadcast %cst_8 : f32 to vector<14x14xf32>
    %54 = vector.extract_strided_slice %52 {offsets = [0, 0], sizes = [14, 16], strides = [1, 1]} : vector<16x16xf32> to vector<14x16xf32>
    %c9 = arith.constant 9 : index
    %55 = memref.load %arg2[%c9] : memref<36xf32, #tpu.memory_space<smem>>
    %56 = vector.extract_strided_slice %54 {offsets = [0, 0], sizes = [14, 14], strides = [1, 1]} : vector<14x16xf32> to vector<14x14xf32>
    %57 = vector.broadcast %55 : f32 to vector<14x14xf32>
    %58 = arith.mulf %56, %57 : vector<14x14xf32>
    %59 = arith.addf %53, %58 : vector<14x14xf32>
    %c10 = arith.constant 10 : index
    %60 = memref.load %arg2[%c10] : memref<36xf32, #tpu.memory_space<smem>>
    %61 = vector.extract_strided_slice %54 {offsets = [0, 1], sizes = [14, 14], strides = [1, 1]} : vector<14x16xf32> to vector<14x14xf32>
    %62 = vector.broadcast %60 : f32 to vector<14x14xf32>
    %63 = arith.mulf %61, %62 : vector<14x14xf32>
    %64 = arith.addf %59, %63 : vector<14x14xf32>
    %c11 = arith.constant 11 : index
    %65 = memref.load %arg2[%c11] : memref<36xf32, #tpu.memory_space<smem>>
    %66 = vector.extract_strided_slice %54 {offsets = [0, 2], sizes = [14, 14], strides = [1, 1]} : vector<14x16xf32> to vector<14x14xf32>
    %67 = vector.broadcast %65 : f32 to vector<14x14xf32>
    %68 = arith.mulf %66, %67 : vector<14x14xf32>
    %69 = arith.addf %64, %68 : vector<14x14xf32>
    %70 = vector.extract_strided_slice %52 {offsets = [1, 0], sizes = [14, 16], strides = [1, 1]} : vector<16x16xf32> to vector<14x16xf32>
    %c12 = arith.constant 12 : index
    %71 = memref.load %arg2[%c12] : memref<36xf32, #tpu.memory_space<smem>>
    %72 = vector.extract_strided_slice %70 {offsets = [0, 0], sizes = [14, 14], strides = [1, 1]} : vector<14x16xf32> to vector<14x14xf32>
    %73 = vector.broadcast %71 : f32 to vector<14x14xf32>
    %74 = arith.mulf %72, %73 : vector<14x14xf32>
    %75 = arith.addf %69, %74 : vector<14x14xf32>
    %c13 = arith.constant 13 : index
    %76 = memref.load %arg2[%c13] : memref<36xf32, #tpu.memory_space<smem>>
    %77 = vector.extract_strided_slice %70 {offsets = [0, 1], sizes = [14, 14], strides = [1, 1]} : vector<14x16xf32> to vector<14x14xf32>
    %78 = vector.broadcast %76 : f32 to vector<14x14xf32>
    %79 = arith.mulf %77, %78 : vector<14x14xf32>
    %80 = arith.addf %75, %79 : vector<14x14xf32>
    %c14 = arith.constant 14 : index
    %81 = memref.load %arg2[%c14] : memref<36xf32, #tpu.memory_space<smem>>
    %82 = vector.extract_strided_slice %70 {offsets = [0, 2], sizes = [14, 14], strides = [1, 1]} : vector<14x16xf32> to vector<14x14xf32>
    %83 = vector.broadcast %81 : f32 to vector<14x14xf32>
    %84 = arith.mulf %82, %83 : vector<14x14xf32>
    %85 = arith.addf %80, %84 : vector<14x14xf32>
    %86 = vector.extract_strided_slice %52 {offsets = [2, 0], sizes = [14, 16], strides = [1, 1]} : vector<16x16xf32> to vector<14x16xf32>
    %c15 = arith.constant 15 : index
    %87 = memref.load %arg2[%c15] : memref<36xf32, #tpu.memory_space<smem>>
    %88 = vector.extract_strided_slice %86 {offsets = [0, 0], sizes = [14, 14], strides = [1, 1]} : vector<14x16xf32> to vector<14x14xf32>
    %89 = vector.broadcast %87 : f32 to vector<14x14xf32>
    %90 = arith.mulf %88, %89 : vector<14x14xf32>
    %91 = arith.addf %85, %90 : vector<14x14xf32>
    %c16 = arith.constant 16 : index
    %92 = memref.load %arg2[%c16] : memref<36xf32, #tpu.memory_space<smem>>
    %93 = vector.extract_strided_slice %86 {offsets = [0, 1], sizes = [14, 14], strides = [1, 1]} : vector<14x16xf32> to vector<14x14xf32>
    %94 = vector.broadcast %92 : f32 to vector<14x14xf32>
    %95 = arith.mulf %93, %94 : vector<14x14xf32>
    %96 = arith.addf %91, %95 : vector<14x14xf32>
    %c17 = arith.constant 17 : index
    %97 = memref.load %arg2[%c17] : memref<36xf32, #tpu.memory_space<smem>>
    %98 = vector.extract_strided_slice %86 {offsets = [0, 2], sizes = [14, 14], strides = [1, 1]} : vector<14x16xf32> to vector<14x14xf32>
    %99 = vector.broadcast %97 : f32 to vector<14x14xf32>
    %100 = arith.mulf %98, %99 : vector<14x14xf32>
    %101 = arith.addf %96, %100 : vector<14x14xf32>
    %c0_9 = arith.constant 0 : index
    %c2_10 = arith.constant 2 : index
    %c0_11 = arith.constant 0 : index
    %c0_12 = arith.constant 0 : index
    %102 = vector.load %arg1[%c0_9, %c2_10, %c0_11, %c0_12] : memref<2x4x16x16xf32, #tpu.memory_space<vmem>>, vector<1x1x16x16xf32>
    %103 = vector.shape_cast %102 : vector<1x1x16x16xf32> to vector<16x16xf32>
    %cst_13 = arith.constant 0.000000e+00 : f32
    %104 = vector.broadcast %cst_13 : f32 to vector<14x14xf32>
    %105 = vector.extract_strided_slice %103 {offsets = [0, 0], sizes = [14, 16], strides = [1, 1]} : vector<16x16xf32> to vector<14x16xf32>
    %c18 = arith.constant 18 : index
    %106 = memref.load %arg2[%c18] : memref<36xf32, #tpu.memory_space<smem>>
    %107 = vector.extract_strided_slice %105 {offsets = [0, 0], sizes = [14, 14], strides = [1, 1]} : vector<14x16xf32> to vector<14x14xf32>
    %108 = vector.broadcast %106 : f32 to vector<14x14xf32>
    %109 = arith.mulf %107, %108 : vector<14x14xf32>
    %110 = arith.addf %104, %109 : vector<14x14xf32>
    %c19 = arith.constant 19 : index
    %111 = memref.load %arg2[%c19] : memref<36xf32, #tpu.memory_space<smem>>
    %112 = vector.extract_strided_slice %105 {offsets = [0, 1], sizes = [14, 14], strides = [1, 1]} : vector<14x16xf32> to vector<14x14xf32>
    %113 = vector.broadcast %111 : f32 to vector<14x14xf32>
    %114 = arith.mulf %112, %113 : vector<14x14xf32>
    %115 = arith.addf %110, %114 : vector<14x14xf32>
    %c20 = arith.constant 20 : index
    %116 = memref.load %arg2[%c20] : memref<36xf32, #tpu.memory_space<smem>>
    %117 = vector.extract_strided_slice %105 {offsets = [0, 2], sizes = [14, 14], strides = [1, 1]} : vector<14x16xf32> to vector<14x14xf32>
    %118 = vector.broadcast %116 : f32 to vector<14x14xf32>
    %119 = arith.mulf %117, %118 : vector<14x14xf32>
    %120 = arith.addf %115, %119 : vector<14x14xf32>
    %121 = vector.extract_strided_slice %103 {offsets = [1, 0], sizes = [14, 16], strides = [1, 1]} : vector<16x16xf32> to vector<14x16xf32>
    %c21 = arith.constant 21 : index
    %122 = memref.load %arg2[%c21] : memref<36xf32, #tpu.memory_space<smem>>
    %123 = vector.extract_strided_slice %121 {offsets = [0, 0], sizes = [14, 14], strides = [1, 1]} : vector<14x16xf32> to vector<14x14xf32>
    %124 = vector.broadcast %122 : f32 to vector<14x14xf32>
    %125 = arith.mulf %123, %124 : vector<14x14xf32>
    %126 = arith.addf %120, %125 : vector<14x14xf32>
    %c22 = arith.constant 22 : index
    %127 = memref.load %arg2[%c22] : memref<36xf32, #tpu.memory_space<smem>>
    %128 = vector.extract_strided_slice %121 {offsets = [0, 1], sizes = [14, 14], strides = [1, 1]} : vector<14x16xf32> to vector<14x14xf32>
    %129 = vector.broadcast %127 : f32 to vector<14x14xf32>
    %130 = arith.mulf %128, %129 : vector<14x14xf32>
    %131 = arith.addf %126, %130 : vector<14x14xf32>
    %c23 = arith.constant 23 : index
    %132 = memref.load %arg2[%c23] : memref<36xf32, #tpu.memory_space<smem>>
    %133 = vector.extract_strided_slice %121 {offsets = [0, 2], sizes = [14, 14], strides = [1, 1]} : vector<14x16xf32> to vector<14x14xf32>
    %134 = vector.broadcast %132 : f32 to vector<14x14xf32>
    %135 = arith.mulf %133, %134 : vector<14x14xf32>
    %136 = arith.addf %131, %135 : vector<14x14xf32>
    %137 = vector.extract_strided_slice %103 {offsets = [2, 0], sizes = [14, 16], strides = [1, 1]} : vector<16x16xf32> to vector<14x16xf32>
    %c24 = arith.constant 24 : index
    %138 = memref.load %arg2[%c24] : memref<36xf32, #tpu.memory_space<smem>>
    %139 = vector.extract_strided_slice %137 {offsets = [0, 0], sizes = [14, 14], strides = [1, 1]} : vector<14x16xf32> to vector<14x14xf32>
    %140 = vector.broadcast %138 : f32 to vector<14x14xf32>
    %141 = arith.mulf %139, %140 : vector<14x14xf32>
    %142 = arith.addf %136, %141 : vector<14x14xf32>
    %c25 = arith.constant 25 : index
    %143 = memref.load %arg2[%c25] : memref<36xf32, #tpu.memory_space<smem>>
    %144 = vector.extract_strided_slice %137 {offsets = [0, 1], sizes = [14, 14], strides = [1, 1]} : vector<14x16xf32> to vector<14x14xf32>
    %145 = vector.broadcast %143 : f32 to vector<14x14xf32>
    %146 = arith.mulf %144, %145 : vector<14x14xf32>
    %147 = arith.addf %142, %146 : vector<14x14xf32>
    %c26 = arith.constant 26 : index
    %148 = memref.load %arg2[%c26] : memref<36xf32, #tpu.memory_space<smem>>
    %149 = vector.extract_strided_slice %137 {offsets = [0, 2], sizes = [14, 14], strides = [1, 1]} : vector<14x16xf32> to vector<14x14xf32>
    %150 = vector.broadcast %148 : f32 to vector<14x14xf32>
    %151 = arith.mulf %149, %150 : vector<14x14xf32>
    %152 = arith.addf %147, %151 : vector<14x14xf32>
    %c0_14 = arith.constant 0 : index
    %c3_15 = arith.constant 3 : index
    %c0_16 = arith.constant 0 : index
    %c0_17 = arith.constant 0 : index
    %153 = vector.load %arg1[%c0_14, %c3_15, %c0_16, %c0_17] : memref<2x4x16x16xf32, #tpu.memory_space<vmem>>, vector<1x1x16x16xf32>
    %154 = vector.shape_cast %153 : vector<1x1x16x16xf32> to vector<16x16xf32>
    %cst_18 = arith.constant 0.000000e+00 : f32
    %155 = vector.broadcast %cst_18 : f32 to vector<14x14xf32>
    %156 = vector.extract_strided_slice %154 {offsets = [0, 0], sizes = [14, 16], strides = [1, 1]} : vector<16x16xf32> to vector<14x16xf32>
    %c27 = arith.constant 27 : index
    %157 = memref.load %arg2[%c27] : memref<36xf32, #tpu.memory_space<smem>>
    %158 = vector.extract_strided_slice %156 {offsets = [0, 0], sizes = [14, 14], strides = [1, 1]} : vector<14x16xf32> to vector<14x14xf32>
    %159 = vector.broadcast %157 : f32 to vector<14x14xf32>
    %160 = arith.mulf %158, %159 : vector<14x14xf32>
    %161 = arith.addf %155, %160 : vector<14x14xf32>
    %c28 = arith.constant 28 : index
    %162 = memref.load %arg2[%c28] : memref<36xf32, #tpu.memory_space<smem>>
    %163 = vector.extract_strided_slice %156 {offsets = [0, 1], sizes = [14, 14], strides = [1, 1]} : vector<14x16xf32> to vector<14x14xf32>
    %164 = vector.broadcast %162 : f32 to vector<14x14xf32>
    %165 = arith.mulf %163, %164 : vector<14x14xf32>
    %166 = arith.addf %161, %165 : vector<14x14xf32>
    %c29 = arith.constant 29 : index
    %167 = memref.load %arg2[%c29] : memref<36xf32, #tpu.memory_space<smem>>
    %168 = vector.extract_strided_slice %156 {offsets = [0, 2], sizes = [14, 14], strides = [1, 1]} : vector<14x16xf32> to vector<14x14xf32>
    %169 = vector.broadcast %167 : f32 to vector<14x14xf32>
    %170 = arith.mulf %168, %169 : vector<14x14xf32>
    %171 = arith.addf %166, %170 : vector<14x14xf32>
    %172 = vector.extract_strided_slice %154 {offsets = [1, 0], sizes = [14, 16], strides = [1, 1]} : vector<16x16xf32> to vector<14x16xf32>
    %c30 = arith.constant 30 : index
    %173 = memref.load %arg2[%c30] : memref<36xf32, #tpu.memory_space<smem>>
    %174 = vector.extract_strided_slice %172 {offsets = [0, 0], sizes = [14, 14], strides = [1, 1]} : vector<14x16xf32> to vector<14x14xf32>
    %175 = vector.broadcast %173 : f32 to vector<14x14xf32>
    %176 = arith.mulf %174, %175 : vector<14x14xf32>
    %177 = arith.addf %171, %176 : vector<14x14xf32>
    %c31 = arith.constant 31 : index
    %178 = memref.load %arg2[%c31] : memref<36xf32, #tpu.memory_space<smem>>
    %179 = vector.extract_strided_slice %172 {offsets = [0, 1], sizes = [14, 14], strides = [1, 1]} : vector<14x16xf32> to vector<14x14xf32>
    %180 = vector.broadcast %178 : f32 to vector<14x14xf32>
    %181 = arith.mulf %179, %180 : vector<14x14xf32>
    %182 = arith.addf %177, %181 : vector<14x14xf32>
    %c32 = arith.constant 32 : index
    %183 = memref.load %arg2[%c32] : memref<36xf32, #tpu.memory_space<smem>>
    %184 = vector.extract_strided_slice %172 {offsets = [0, 2], sizes = [14, 14], strides = [1, 1]} : vector<14x16xf32> to vector<14x14xf32>
    %185 = vector.broadcast %183 : f32 to vector<14x14xf32>
    %186 = arith.mulf %184, %185 : vector<14x14xf32>
    %187 = arith.addf %182, %186 : vector<14x14xf32>
    %188 = vector.extract_strided_slice %154 {offsets = [2, 0], sizes = [14, 16], strides = [1, 1]} : vector<16x16xf32> to vector<14x16xf32>
    %c33 = arith.constant 33 : index
    %189 = memref.load %arg2[%c33] : memref<36xf32, #tpu.memory_space<smem>>
    %190 = vector.extract_strided_slice %188 {offsets = [0, 0], sizes = [14, 14], strides = [1, 1]} : vector<14x16xf32> to vector<14x14xf32>
    %191 = vector.broadcast %189 : f32 to vector<14x14xf32>
    %192 = arith.mulf %190, %191 : vector<14x14xf32>
    %193 = arith.addf %187, %192 : vector<14x14xf32>
    %c34 = arith.constant 34 : index
    %194 = memref.load %arg2[%c34] : memref<36xf32, #tpu.memory_space<smem>>
    %195 = vector.extract_strided_slice %188 {offsets = [0, 1], sizes = [14, 14], strides = [1, 1]} : vector<14x16xf32> to vector<14x14xf32>
    %196 = vector.broadcast %194 : f32 to vector<14x14xf32>
    %197 = arith.mulf %195, %196 : vector<14x14xf32>
    %198 = arith.addf %193, %197 : vector<14x14xf32>
    %c35 = arith.constant 35 : index
    %199 = memref.load %arg2[%c35] : memref<36xf32, #tpu.memory_space<smem>>
    %200 = vector.extract_strided_slice %188 {offsets = [0, 2], sizes = [14, 14], strides = [1, 1]} : vector<14x16xf32> to vector<14x14xf32>
    %201 = vector.broadcast %199 : f32 to vector<14x14xf32>
    %202 = arith.mulf %200, %201 : vector<14x14xf32>
    %203 = arith.addf %198, %202 : vector<14x14xf32>
    %c0_19 = arith.constant 0 : index
    %204 = memref.load %arg3[%c0_19] : memref<32xf32, #tpu.memory_space<smem>>
    %205 = vector.broadcast %204 : f32 to vector<14x14xf32>
    %206 = arith.mulf %50, %205 : vector<14x14xf32>
    %c1_20 = arith.constant 1 : index
    %207 = memref.load %arg3[%c1_20] : memref<32xf32, #tpu.memory_space<smem>>
    %208 = vector.broadcast %207 : f32 to vector<14x14xf32>
    %209 = arith.mulf %101, %208 : vector<14x14xf32>
    %210 = arith.addf %206, %209 : vector<14x14xf32>
    %c2_21 = arith.constant 2 : index
    %211 = memref.load %arg3[%c2_21] : memref<32xf32, #tpu.memory_space<smem>>
    %212 = vector.broadcast %211 : f32 to vector<14x14xf32>
    %213 = arith.mulf %152, %212 : vector<14x14xf32>
    %214 = arith.addf %210, %213 : vector<14x14xf32>
    %c3_22 = arith.constant 3 : index
    %215 = memref.load %arg3[%c3_22] : memref<32xf32, #tpu.memory_space<smem>>
    %216 = vector.broadcast %215 : f32 to vector<14x14xf32>
    %217 = arith.mulf %203, %216 : vector<14x14xf32>
    %218 = arith.addf %214, %217 : vector<14x14xf32>
    %c0_23 = arith.constant 0 : index
    %c0_24 = arith.constant 0 : index
    %c0_25 = arith.constant 0 : index
    %c0_26 = arith.constant 0 : index
    %219 = vector.load %arg4[%c0_23, %c0_24, %c0_25, %c0_26] : memref<2x8x14x14xf32, #tpu.memory_space<vmem>>, vector<1x1x14x14xf32>
    %220 = vector.shape_cast %219 : vector<1x1x14x14xf32> to vector<14x14xf32>
    %221 = vector.shape_cast %218 : vector<14x14xf32> to vector<1x1x14x14xf32>
    tpu.vector_store %arg4[%c0_23, %c0_24, %c0_25, %c0_26], %221 {strides = array<i32>} : memref<2x8x14x14xf32, #tpu.memory_space<vmem>>, vector<1x1x14x14xf32>,
    %c4_27 = arith.constant 4 : index
    %222 = memref.load %arg3[%c4_27] : memref<32xf32, #tpu.memory_space<smem>>
    %223 = vector.broadcast %222 : f32 to vector<14x14xf32>
    %224 = arith.mulf %50, %223 : vector<14x14xf32>
    %c5_28 = arith.constant 5 : index
    %225 = memref.load %arg3[%c5_28] : memref<32xf32, #tpu.memory_space<smem>>
    %226 = vector.broadcast %225 : f32 to vector<14x14xf32>
    %227 = arith.mulf %101, %226 : vector<14x14xf32>
    %228 = arith.addf %224, %227 : vector<14x14xf32>
    %c6_29 = arith.constant 6 : index
    %229 = memref.load %arg3[%c6_29] : memref<32xf32, #tpu.memory_space<smem>>
    %230 = vector.broadcast %229 : f32 to vector<14x14xf32>
    %231 = arith.mulf %152, %230 : vector<14x14xf32>
    %232 = arith.addf %228, %231 : vector<14x14xf32>
    %c7_30 = arith.constant 7 : index
    %233 = memref.load %arg3[%c7_30] : memref<32xf32, #tpu.memory_space<smem>>
    %234 = vector.broadcast %233 : f32 to vector<14x14xf32>
    %235 = arith.mulf %203, %234 : vector<14x14xf32>
    %236 = arith.addf %232, %235 : vector<14x14xf32>
    %c0_31 = arith.constant 0 : index
    %c1_32 = arith.constant 1 : index
    %c0_33 = arith.constant 0 : index
    %c0_34 = arith.constant 0 : index
    %237 = vector.load %arg4[%c0_31, %c1_32, %c0_33, %c0_34] : memref<2x8x14x14xf32, #tpu.memory_space<vmem>>, vector<1x1x14x14xf32>
    %238 = vector.shape_cast %237 : vector<1x1x14x14xf32> to vector<14x14xf32>
    %239 = vector.shape_cast %236 : vector<14x14xf32> to vector<1x1x14x14xf32>
    tpu.vector_store %arg4[%c0_31, %c1_32, %c0_33, %c0_34], %239 {strides = array<i32>} : memref<2x8x14x14xf32, #tpu.memory_space<vmem>>, vector<1x1x14x14xf32>,
    %c8_35 = arith.constant 8 : index
    %240 = memref.load %arg3[%c8_35] : memref<32xf32, #tpu.memory_space<smem>>
    %241 = vector.broadcast %240 : f32 to vector<14x14xf32>
    %242 = arith.mulf %50, %241 : vector<14x14xf32>
    %c9_36 = arith.constant 9 : index
    %243 = memref.load %arg3[%c9_36] : memref<32xf32, #tpu.memory_space<smem>>
    %244 = vector.broadcast %243 : f32 to vector<14x14xf32>
    %245 = arith.mulf %101, %244 : vector<14x14xf32>
    %246 = arith.addf %242, %245 : vector<14x14xf32>
    %c10_37 = arith.constant 10 : index
    %247 = memref.load %arg3[%c10_37] : memref<32xf32, #tpu.memory_space<smem>>
    %248 = vector.broadcast %247 : f32 to vector<14x14xf32>
    %249 = arith.mulf %152, %248 : vector<14x14xf32>
    %250 = arith.addf %246, %249 : vector<14x14xf32>
    %c11_38 = arith.constant 11 : index
    %251 = memref.load %arg3[%c11_38] : memref<32xf32, #tpu.memory_space<smem>>
    %252 = vector.broadcast %251 : f32 to vector<14x14xf32>
    %253 = arith.mulf %203, %252 : vector<14x14xf32>
    %254 = arith.addf %250, %253 : vector<14x14xf32>
    %c0_39 = arith.constant 0 : index
    %c2_40 = arith.constant 2 : index
    %c0_41 = arith.constant 0 : index
    %c0_42 = arith.constant 0 : index
    %255 = vector.load %arg4[%c0_39, %c2_40, %c0_41, %c0_42] : memref<2x8x14x14xf32, #tpu.memory_space<vmem>>, vector<1x1x14x14xf32>
    %256 = vector.shape_cast %255 : vector<1x1x14x14xf32> to vector<14x14xf32>
    %257 = vector.shape_cast %254 : vector<14x14xf32> to vector<1x1x14x14xf32>
    tpu.vector_store %arg4[%c0_39, %c2_40, %c0_41, %c0_42], %257 {strides = array<i32>} : memref<2x8x14x14xf32, #tpu.memory_space<vmem>>, vector<1x1x14x14xf32>,
    %c12_43 = arith.constant 12 : index
    %258 = memref.load %arg3[%c12_43] : memref<32xf32, #tpu.memory_space<smem>>
    %259 = vector.broadcast %258 : f32 to vector<14x14xf32>
    %260 = arith.mulf %50, %259 : vector<14x14xf32>
    %c13_44 = arith.constant 13 : index
    %261 = memref.load %arg3[%c13_44] : memref<32xf32, #tpu.memory_space<smem>>
    %262 = vector.broadcast %261 : f32 to vector<14x14xf32>
    %263 = arith.mulf %101, %262 : vector<14x14xf32>
    %264 = arith.addf %260, %263 : vector<14x14xf32>
    %c14_45 = arith.constant 14 : index
    %265 = memref.load %arg3[%c14_45] : memref<32xf32, #tpu.memory_space<smem>>
    %266 = vector.broadcast %265 : f32 to vector<14x14xf32>
    %267 = arith.mulf %152, %266 : vector<14x14xf32>
    %268 = arith.addf %264, %267 : vector<14x14xf32>
    %c15_46 = arith.constant 15 : index
    %269 = memref.load %arg3[%c15_46] : memref<32xf32, #tpu.memory_space<smem>>
    %270 = vector.broadcast %269 : f32 to vector<14x14xf32>
    %271 = arith.mulf %203, %270 : vector<14x14xf32>
    %272 = arith.addf %268, %271 : vector<14x14xf32>
    %c0_47 = arith.constant 0 : index
    %c3_48 = arith.constant 3 : index
    %c0_49 = arith.constant 0 : index
    %c0_50 = arith.constant 0 : index
    %273 = vector.load %arg4[%c0_47, %c3_48, %c0_49, %c0_50] : memref<2x8x14x14xf32, #tpu.memory_space<vmem>>, vector<1x1x14x14xf32>
    %274 = vector.shape_cast %273 : vector<1x1x14x14xf32> to vector<14x14xf32>
    %275 = vector.shape_cast %272 : vector<14x14xf32> to vector<1x1x14x14xf32>
    tpu.vector_store %arg4[%c0_47, %c3_48, %c0_49, %c0_50], %275 {strides = array<i32>} : memref<2x8x14x14xf32, #tpu.memory_space<vmem>>, vector<1x1x14x14xf32>,
    %c16_51 = arith.constant 16 : index
    %276 = memref.load %arg3[%c16_51] : memref<32xf32, #tpu.memory_space<smem>>
    %277 = vector.broadcast %276 : f32 to vector<14x14xf32>
    %278 = arith.mulf %50, %277 : vector<14x14xf32>
    %c17_52 = arith.constant 17 : index
    %279 = memref.load %arg3[%c17_52] : memref<32xf32, #tpu.memory_space<smem>>
    %280 = vector.broadcast %279 : f32 to vector<14x14xf32>
    %281 = arith.mulf %101, %280 : vector<14x14xf32>
    %282 = arith.addf %278, %281 : vector<14x14xf32>
    %c18_53 = arith.constant 18 : index
    %283 = memref.load %arg3[%c18_53] : memref<32xf32, #tpu.memory_space<smem>>
    %284 = vector.broadcast %283 : f32 to vector<14x14xf32>
    %285 = arith.mulf %152, %284 : vector<14x14xf32>
    %286 = arith.addf %282, %285 : vector<14x14xf32>
    %c19_54 = arith.constant 19 : index
    %287 = memref.load %arg3[%c19_54] : memref<32xf32, #tpu.memory_space<smem>>
    %288 = vector.broadcast %287 : f32 to vector<14x14xf32>
    %289 = arith.mulf %203, %288 : vector<14x14xf32>
    %290 = arith.addf %286, %289 : vector<14x14xf32>
    %c0_55 = arith.constant 0 : index
    %c4_56 = arith.constant 4 : index
    %c0_57 = arith.constant 0 : index
    %c0_58 = arith.constant 0 : index
    %291 = vector.load %arg4[%c0_55, %c4_56, %c0_57, %c0_58] : memref<2x8x14x14xf32, #tpu.memory_space<vmem>>, vector<1x1x14x14xf32>
    %292 = vector.shape_cast %291 : vector<1x1x14x14xf32> to vector<14x14xf32>
    %293 = vector.shape_cast %290 : vector<14x14xf32> to vector<1x1x14x14xf32>
    tpu.vector_store %arg4[%c0_55, %c4_56, %c0_57, %c0_58], %293 {strides = array<i32>} : memref<2x8x14x14xf32, #tpu.memory_space<vmem>>, vector<1x1x14x14xf32>,
    %c20_59 = arith.constant 20 : index
    %294 = memref.load %arg3[%c20_59] : memref<32xf32, #tpu.memory_space<smem>>
    %295 = vector.broadcast %294 : f32 to vector<14x14xf32>
    %296 = arith.mulf %50, %295 : vector<14x14xf32>
    %c21_60 = arith.constant 21 : index
    %297 = memref.load %arg3[%c21_60] : memref<32xf32, #tpu.memory_space<smem>>
    %298 = vector.broadcast %297 : f32 to vector<14x14xf32>
    %299 = arith.mulf %101, %298 : vector<14x14xf32>
    %300 = arith.addf %296, %299 : vector<14x14xf32>
    %c22_61 = arith.constant 22 : index
    %301 = memref.load %arg3[%c22_61] : memref<32xf32, #tpu.memory_space<smem>>
    %302 = vector.broadcast %301 : f32 to vector<14x14xf32>
    %303 = arith.mulf %152, %302 : vector<14x14xf32>
    %304 = arith.addf %300, %303 : vector<14x14xf32>
    %c23_62 = arith.constant 23 : index
    %305 = memref.load %arg3[%c23_62] : memref<32xf32, #tpu.memory_space<smem>>
    %306 = vector.broadcast %305 : f32 to vector<14x14xf32>
    %307 = arith.mulf %203, %306 : vector<14x14xf32>
    %308 = arith.addf %304, %307 : vector<14x14xf32>
    %c0_63 = arith.constant 0 : index
    %c5_64 = arith.constant 5 : index
    %c0_65 = arith.constant 0 : index
    %c0_66 = arith.constant 0 : index
    %309 = vector.load %arg4[%c0_63, %c5_64, %c0_65, %c0_66] : memref<2x8x14x14xf32, #tpu.memory_space<vmem>>, vector<1x1x14x14xf32>
    %310 = vector.shape_cast %309 : vector<1x1x14x14xf32> to vector<14x14xf32>
    %311 = vector.shape_cast %308 : vector<14x14xf32> to vector<1x1x14x14xf32>
    tpu.vector_store %arg4[%c0_63, %c5_64, %c0_65, %c0_66], %311 {strides = array<i32>} : memref<2x8x14x14xf32, #tpu.memory_space<vmem>>, vector<1x1x14x14xf32>,
    %c24_67 = arith.constant 24 : index
    %312 = memref.load %arg3[%c24_67] : memref<32xf32, #tpu.memory_space<smem>>
    %313 = vector.broadcast %312 : f32 to vector<14x14xf32>
    %314 = arith.mulf %50, %313 : vector<14x14xf32>
    %c25_68 = arith.constant 25 : index
    %315 = memref.load %arg3[%c25_68] : memref<32xf32, #tpu.memory_space<smem>>
    %316 = vector.broadcast %315 : f32 to vector<14x14xf32>
    %317 = arith.mulf %101, %316 : vector<14x14xf32>
    %318 = arith.addf %314, %317 : vector<14x14xf32>
    %c26_69 = arith.constant 26 : index
    %319 = memref.load %arg3[%c26_69] : memref<32xf32, #tpu.memory_space<smem>>
    %320 = vector.broadcast %319 : f32 to vector<14x14xf32>
    %321 = arith.mulf %152, %320 : vector<14x14xf32>
    %322 = arith.addf %318, %321 : vector<14x14xf32>
    %c27_70 = arith.constant 27 : index
    %323 = memref.load %arg3[%c27_70] : memref<32xf32, #tpu.memory_space<smem>>
    %324 = vector.broadcast %323 : f32 to vector<14x14xf32>
    %325 = arith.mulf %203, %324 : vector<14x14xf32>
    %326 = arith.addf %322, %325 : vector<14x14xf32>
    %c0_71 = arith.constant 0 : index
    %c6_72 = arith.constant 6 : index
    %c0_73 = arith.constant 0 : index
    %c0_74 = arith.constant 0 : index
    %327 = vector.load %arg4[%c0_71, %c6_72, %c0_73, %c0_74] : memref<2x8x14x14xf32, #tpu.memory_space<vmem>>, vector<1x1x14x14xf32>
    %328 = vector.shape_cast %327 : vector<1x1x14x14xf32> to vector<14x14xf32>
    %329 = vector.shape_cast %326 : vector<14x14xf32> to vector<1x1x14x14xf32>
    tpu.vector_store %arg4[%c0_71, %c6_72, %c0_73, %c0_74], %329 {strides = array<i32>} : memref<2x8x14x14xf32, #tpu.memory_space<vmem>>, vector<1x1x14x14xf32>,
    %c28_75 = arith.constant 28 : index
    %330 = memref.load %arg3[%c28_75] : memref<32xf32, #tpu.memory_space<smem>>
    %331 = vector.broadcast %330 : f32 to vector<14x14xf32>
    %332 = arith.mulf %50, %331 : vector<14x14xf32>
    %c29_76 = arith.constant 29 : index
    %333 = memref.load %arg3[%c29_76] : memref<32xf32, #tpu.memory_space<smem>>
    %334 = vector.broadcast %333 : f32 to vector<14x14xf32>
    %335 = arith.mulf %101, %334 : vector<14x14xf32>
    %336 = arith.addf %332, %335 : vector<14x14xf32>
    %c30_77 = arith.constant 30 : index
    %337 = memref.load %arg3[%c30_77] : memref<32xf32, #tpu.memory_space<smem>>
    %338 = vector.broadcast %337 : f32 to vector<14x14xf32>
    %339 = arith.mulf %152, %338 : vector<14x14xf32>
    %340 = arith.addf %336, %339 : vector<14x14xf32>
    %c31_78 = arith.constant 31 : index
    %341 = memref.load %arg3[%c31_78] : memref<32xf32, #tpu.memory_space<smem>>
    %342 = vector.broadcast %341 : f32 to vector<14x14xf32>
    %343 = arith.mulf %203, %342 : vector<14x14xf32>
    %344 = arith.addf %340, %343 : vector<14x14xf32>
    %c0_79 = arith.constant 0 : index
    %c7_80 = arith.constant 7 : index
    %c0_81 = arith.constant 0 : index
    %c0_82 = arith.constant 0 : index
    %345 = vector.load %arg4[%c0_79, %c7_80, %c0_81, %c0_82] : memref<2x8x14x14xf32, #tpu.memory_space<vmem>>, vector<1x1x14x14xf32>
    %346 = vector.shape_cast %345 : vector<1x1x14x14xf32> to vector<14x14xf32>
    %347 = vector.shape_cast %344 : vector<14x14xf32> to vector<1x1x14x14xf32>
    tpu.vector_store %arg4[%c0_79, %c7_80, %c0_81, %c0_82], %347 {strides = array<i32>} : memref<2x8x14x14xf32, #tpu.memory_space<vmem>>, vector<1x1x14x14xf32>,
    %c1_83 = arith.constant 1 : index
    %c0_84 = arith.constant 0 : index
    %c0_85 = arith.constant 0 : index
    %c0_86 = arith.constant 0 : index
    %348 = vector.load %arg1[%c1_83, %c0_84, %c0_85, %c0_86] : memref<2x4x16x16xf32, #tpu.memory_space<vmem>>, vector<1x1x16x16xf32>
    %349 = vector.shape_cast %348 : vector<1x1x16x16xf32> to vector<16x16xf32>
    %cst_87 = arith.constant 0.000000e+00 : f32
    %350 = vector.broadcast %cst_87 : f32 to vector<14x14xf32>
    %351 = vector.extract_strided_slice %349 {offsets = [0, 0], sizes = [14, 16], strides = [1, 1]} : vector<16x16xf32> to vector<14x16xf32>
    %c0_88 = arith.constant 0 : index
    %352 = memref.load %arg2[%c0_88] : memref<36xf32, #tpu.memory_space<smem>>
    %353 = vector.extract_strided_slice %351 {offsets = [0, 0], sizes = [14, 14], strides = [1, 1]} : vector<14x16xf32> to vector<14x14xf32>
    %354 = vector.broadcast %352 : f32 to vector<14x14xf32>
    %355 = arith.mulf %353, %354 : vector<14x14xf32>
    %356 = arith.addf %350, %355 : vector<14x14xf32>
    %c1_89 = arith.constant 1 : index
    %357 = memref.load %arg2[%c1_89] : memref<36xf32, #tpu.memory_space<smem>>
    %358 = vector.extract_strided_slice %351 {offsets = [0, 1], sizes = [14, 14], strides = [1, 1]} : vector<14x16xf32> to vector<14x14xf32>
    %359 = vector.broadcast %357 : f32 to vector<14x14xf32>
    %360 = arith.mulf %358, %359 : vector<14x14xf32>
    %361 = arith.addf %356, %360 : vector<14x14xf32>
    %c2_90 = arith.constant 2 : index
    %362 = memref.load %arg2[%c2_90] : memref<36xf32, #tpu.memory_space<smem>>
    %363 = vector.extract_strided_slice %351 {offsets = [0, 2], sizes = [14, 14], strides = [1, 1]} : vector<14x16xf32> to vector<14x14xf32>
    %364 = vector.broadcast %362 : f32 to vector<14x14xf32>
    %365 = arith.mulf %363, %364 : vector<14x14xf32>
    %366 = arith.addf %361, %365 : vector<14x14xf32>
    %367 = vector.extract_strided_slice %349 {offsets = [1, 0], sizes = [14, 16], strides = [1, 1]} : vector<16x16xf32> to vector<14x16xf32>
    %c3_91 = arith.constant 3 : index
    %368 = memref.load %arg2[%c3_91] : memref<36xf32, #tpu.memory_space<smem>>
    %369 = vector.extract_strided_slice %367 {offsets = [0, 0], sizes = [14, 14], strides = [1, 1]} : vector<14x16xf32> to vector<14x14xf32>
    %370 = vector.broadcast %368 : f32 to vector<14x14xf32>
    %371 = arith.mulf %369, %370 : vector<14x14xf32>
    %372 = arith.addf %366, %371 : vector<14x14xf32>
    %c4_92 = arith.constant 4 : index
    %373 = memref.load %arg2[%c4_92] : memref<36xf32, #tpu.memory_space<smem>>
    %374 = vector.extract_strided_slice %367 {offsets = [0, 1], sizes = [14, 14], strides = [1, 1]} : vector<14x16xf32> to vector<14x14xf32>
    %375 = vector.broadcast %373 : f32 to vector<14x14xf32>
    %376 = arith.mulf %374, %375 : vector<14x14xf32>
    %377 = arith.addf %372, %376 : vector<14x14xf32>
    %c5_93 = arith.constant 5 : index
    %378 = memref.load %arg2[%c5_93] : memref<36xf32, #tpu.memory_space<smem>>
    %379 = vector.extract_strided_slice %367 {offsets = [0, 2], sizes = [14, 14], strides = [1, 1]} : vector<14x16xf32> to vector<14x14xf32>
    %380 = vector.broadcast %378 : f32 to vector<14x14xf32>
    %381 = arith.mulf %379, %380 : vector<14x14xf32>
    %382 = arith.addf %377, %381 : vector<14x14xf32>
    %383 = vector.extract_strided_slice %349 {offsets = [2, 0], sizes = [14, 16], strides = [1, 1]} : vector<16x16xf32> to vector<14x16xf32>
    %c6_94 = arith.constant 6 : index
    %384 = memref.load %arg2[%c6_94] : memref<36xf32, #tpu.memory_space<smem>>
    %385 = vector.extract_strided_slice %383 {offsets = [0, 0], sizes = [14, 14], strides = [1, 1]} : vector<14x16xf32> to vector<14x14xf32>
    %386 = vector.broadcast %384 : f32 to vector<14x14xf32>
    %387 = arith.mulf %385, %386 : vector<14x14xf32>
    %388 = arith.addf %382, %387 : vector<14x14xf32>
    %c7_95 = arith.constant 7 : index
    %389 = memref.load %arg2[%c7_95] : memref<36xf32, #tpu.memory_space<smem>>
    %390 = vector.extract_strided_slice %383 {offsets = [0, 1], sizes = [14, 14], strides = [1, 1]} : vector<14x16xf32> to vector<14x14xf32>
    %391 = vector.broadcast %389 : f32 to vector<14x14xf32>
    %392 = arith.mulf %390, %391 : vector<14x14xf32>
    %393 = arith.addf %388, %392 : vector<14x14xf32>
    %c8_96 = arith.constant 8 : index
    %394 = memref.load %arg2[%c8_96] : memref<36xf32, #tpu.memory_space<smem>>
    %395 = vector.extract_strided_slice %383 {offsets = [0, 2], sizes = [14, 14], strides = [1, 1]} : vector<14x16xf32> to vector<14x14xf32>
    %396 = vector.broadcast %394 : f32 to vector<14x14xf32>
    %397 = arith.mulf %395, %396 : vector<14x14xf32>
    %398 = arith.addf %393, %397 : vector<14x14xf32>
    %c1_97 = arith.constant 1 : index
    %c1_98 = arith.constant 1 : index
    %c0_99 = arith.constant 0 : index
    %c0_100 = arith.constant 0 : index
    %399 = vector.load %arg1[%c1_97, %c1_98, %c0_99, %c0_100] : memref<2x4x16x16xf32, #tpu.memory_space<vmem>>, vector<1x1x16x16xf32>
    %400 = vector.shape_cast %399 : vector<1x1x16x16xf32> to vector<16x16xf32>
    %cst_101 = arith.constant 0.000000e+00 : f32
    %401 = vector.broadcast %cst_101 : f32 to vector<14x14xf32>
    %402 = vector.extract_strided_slice %400 {offsets = [0, 0], sizes = [14, 16], strides = [1, 1]} : vector<16x16xf32> to vector<14x16xf32>
    %c9_102 = arith.constant 9 : index
    %403 = memref.load %arg2[%c9_102] : memref<36xf32, #tpu.memory_space<smem>>
    %404 = vector.extract_strided_slice %402 {offsets = [0, 0], sizes = [14, 14], strides = [1, 1]} : vector<14x16xf32> to vector<14x14xf32>
    %405 = vector.broadcast %403 : f32 to vector<14x14xf32>
    %406 = arith.mulf %404, %405 : vector<14x14xf32>
    %407 = arith.addf %401, %406 : vector<14x14xf32>
    %c10_103 = arith.constant 10 : index
    %408 = memref.load %arg2[%c10_103] : memref<36xf32, #tpu.memory_space<smem>>
    %409 = vector.extract_strided_slice %402 {offsets = [0, 1], sizes = [14, 14], strides = [1, 1]} : vector<14x16xf32> to vector<14x14xf32>
    %410 = vector.broadcast %408 : f32 to vector<14x14xf32>
    %411 = arith.mulf %409, %410 : vector<14x14xf32>
    %412 = arith.addf %407, %411 : vector<14x14xf32>
    %c11_104 = arith.constant 11 : index
    %413 = memref.load %arg2[%c11_104] : memref<36xf32, #tpu.memory_space<smem>>
    %414 = vector.extract_strided_slice %402 {offsets = [0, 2], sizes = [14, 14], strides = [1, 1]} : vector<14x16xf32> to vector<14x14xf32>
    %415 = vector.broadcast %413 : f32 to vector<14x14xf32>
    %416 = arith.mulf %414, %415 : vector<14x14xf32>
    %417 = arith.addf %412, %416 : vector<14x14xf32>
    %418 = vector.extract_strided_slice %400 {offsets = [1, 0], sizes = [14, 16], strides = [1, 1]} : vector<16x16xf32> to vector<14x16xf32>
    %c12_105 = arith.constant 12 : index
    %419 = memref.load %arg2[%c12_105] : memref<36xf32, #tpu.memory_space<smem>>
    %420 = vector.extract_strided_slice %418 {offsets = [0, 0], sizes = [14, 14], strides = [1, 1]} : vector<14x16xf32> to vector<14x14xf32>
    %421 = vector.broadcast %419 : f32 to vector<14x14xf32>
    %422 = arith.mulf %420, %421 : vector<14x14xf32>
    %423 = arith.addf %417, %422 : vector<14x14xf32>
    %c13_106 = arith.constant 13 : index
    %424 = memref.load %arg2[%c13_106] : memref<36xf32, #tpu.memory_space<smem>>
    %425 = vector.extract_strided_slice %418 {offsets = [0, 1], sizes = [14, 14], strides = [1, 1]} : vector<14x16xf32> to vector<14x14xf32>
    %426 = vector.broadcast %424 : f32 to vector<14x14xf32>
    %427 = arith.mulf %425, %426 : vector<14x14xf32>
    %428 = arith.addf %423, %427 : vector<14x14xf32>
    %c14_107 = arith.constant 14 : index
    %429 = memref.load %arg2[%c14_107] : memref<36xf32, #tpu.memory_space<smem>>
    %430 = vector.extract_strided_slice %418 {offsets = [0, 2], sizes = [14, 14], strides = [1, 1]} : vector<14x16xf32> to vector<14x14xf32>
    %431 = vector.broadcast %429 : f32 to vector<14x14xf32>
    %432 = arith.mulf %430, %431 : vector<14x14xf32>
    %433 = arith.addf %428, %432 : vector<14x14xf32>
    %434 = vector.extract_strided_slice %400 {offsets = [2, 0], sizes = [14, 16], strides = [1, 1]} : vector<16x16xf32> to vector<14x16xf32>
    %c15_108 = arith.constant 15 : index
    %435 = memref.load %arg2[%c15_108] : memref<36xf32, #tpu.memory_space<smem>>
    %436 = vector.extract_strided_slice %434 {offsets = [0, 0], sizes = [14, 14], strides = [1, 1]} : vector<14x16xf32> to vector<14x14xf32>
    %437 = vector.broadcast %435 : f32 to vector<14x14xf32>
    %438 = arith.mulf %436, %437 : vector<14x14xf32>
    %439 = arith.addf %433, %438 : vector<14x14xf32>
    %c16_109 = arith.constant 16 : index
    %440 = memref.load %arg2[%c16_109] : memref<36xf32, #tpu.memory_space<smem>>
    %441 = vector.extract_strided_slice %434 {offsets = [0, 1], sizes = [14, 14], strides = [1, 1]} : vector<14x16xf32> to vector<14x14xf32>
    %442 = vector.broadcast %440 : f32 to vector<14x14xf32>
    %443 = arith.mulf %441, %442 : vector<14x14xf32>
    %444 = arith.addf %439, %443 : vector<14x14xf32>
    %c17_110 = arith.constant 17 : index
    %445 = memref.load %arg2[%c17_110] : memref<36xf32, #tpu.memory_space<smem>>
    %446 = vector.extract_strided_slice %434 {offsets = [0, 2], sizes = [14, 14], strides = [1, 1]} : vector<14x16xf32> to vector<14x14xf32>
    %447 = vector.broadcast %445 : f32 to vector<14x14xf32>
    %448 = arith.mulf %446, %447 : vector<14x14xf32>
    %449 = arith.addf %444, %448 : vector<14x14xf32>
    %c1_111 = arith.constant 1 : index
    %c2_112 = arith.constant 2 : index
    %c0_113 = arith.constant 0 : index
    %c0_114 = arith.constant 0 : index
    %450 = vector.load %arg1[%c1_111, %c2_112, %c0_113, %c0_114] : memref<2x4x16x16xf32, #tpu.memory_space<vmem>>, vector<1x1x16x16xf32>
    %451 = vector.shape_cast %450 : vector<1x1x16x16xf32> to vector<16x16xf32>
    %cst_115 = arith.constant 0.000000e+00 : f32
    %452 = vector.broadcast %cst_115 : f32 to vector<14x14xf32>
    %453 = vector.extract_strided_slice %451 {offsets = [0, 0], sizes = [14, 16], strides = [1, 1]} : vector<16x16xf32> to vector<14x16xf32>
    %c18_116 = arith.constant 18 : index
    %454 = memref.load %arg2[%c18_116] : memref<36xf32, #tpu.memory_space<smem>>
    %455 = vector.extract_strided_slice %453 {offsets = [0, 0], sizes = [14, 14], strides = [1, 1]} : vector<14x16xf32> to vector<14x14xf32>
    %456 = vector.broadcast %454 : f32 to vector<14x14xf32>
    %457 = arith.mulf %455, %456 : vector<14x14xf32>
    %458 = arith.addf %452, %457 : vector<14x14xf32>
    %c19_117 = arith.constant 19 : index
    %459 = memref.load %arg2[%c19_117] : memref<36xf32, #tpu.memory_space<smem>>
    %460 = vector.extract_strided_slice %453 {offsets = [0, 1], sizes = [14, 14], strides = [1, 1]} : vector<14x16xf32> to vector<14x14xf32>
    %461 = vector.broadcast %459 : f32 to vector<14x14xf32>
    %462 = arith.mulf %460, %461 : vector<14x14xf32>
    %463 = arith.addf %458, %462 : vector<14x14xf32>
    %c20_118 = arith.constant 20 : index
    %464 = memref.load %arg2[%c20_118] : memref<36xf32, #tpu.memory_space<smem>>
    %465 = vector.extract_strided_slice %453 {offsets = [0, 2], sizes = [14, 14], strides = [1, 1]} : vector<14x16xf32> to vector<14x14xf32>
    %466 = vector.broadcast %464 : f32 to vector<14x14xf32>
    %467 = arith.mulf %465, %466 : vector<14x14xf32>
    %468 = arith.addf %463, %467 : vector<14x14xf32>
    %469 = vector.extract_strided_slice %451 {offsets = [1, 0], sizes = [14, 16], strides = [1, 1]} : vector<16x16xf32> to vector<14x16xf32>
    %c21_119 = arith.constant 21 : index
    %470 = memref.load %arg2[%c21_119] : memref<36xf32, #tpu.memory_space<smem>>
    %471 = vector.extract_strided_slice %469 {offsets = [0, 0], sizes = [14, 14], strides = [1, 1]} : vector<14x16xf32> to vector<14x14xf32>
    %472 = vector.broadcast %470 : f32 to vector<14x14xf32>
    %473 = arith.mulf %471, %472 : vector<14x14xf32>
    %474 = arith.addf %468, %473 : vector<14x14xf32>
    %c22_120 = arith.constant 22 : index
    %475 = memref.load %arg2[%c22_120] : memref<36xf32, #tpu.memory_space<smem>>
    %476 = vector.extract_strided_slice %469 {offsets = [0, 1], sizes = [14, 14], strides = [1, 1]} : vector<14x16xf32> to vector<14x14xf32>
    %477 = vector.broadcast %475 : f32 to vector<14x14xf32>
    %478 = arith.mulf %476, %477 : vector<14x14xf32>
    %479 = arith.addf %474, %478 : vector<14x14xf32>
    %c23_121 = arith.constant 23 : index
    %480 = memref.load %arg2[%c23_121] : memref<36xf32, #tpu.memory_space<smem>>
    %481 = vector.extract_strided_slice %469 {offsets = [0, 2], sizes = [14, 14], strides = [1, 1]} : vector<14x16xf32> to vector<14x14xf32>
    %482 = vector.broadcast %480 : f32 to vector<14x14xf32>
    %483 = arith.mulf %481, %482 : vector<14x14xf32>
    %484 = arith.addf %479, %483 : vector<14x14xf32>
    %485 = vector.extract_strided_slice %451 {offsets = [2, 0], sizes = [14, 16], strides = [1, 1]} : vector<16x16xf32> to vector<14x16xf32>
    %c24_122 = arith.constant 24 : index
    %486 = memref.load %arg2[%c24_122] : memref<36xf32, #tpu.memory_space<smem>>
    %487 = vector.extract_strided_slice %485 {offsets = [0, 0], sizes = [14, 14], strides = [1, 1]} : vector<14x16xf32> to vector<14x14xf32>
    %488 = vector.broadcast %486 : f32 to vector<14x14xf32>
    %489 = arith.mulf %487, %488 : vector<14x14xf32>
    %490 = arith.addf %484, %489 : vector<14x14xf32>
    %c25_123 = arith.constant 25 : index
    %491 = memref.load %arg2[%c25_123] : memref<36xf32, #tpu.memory_space<smem>>
    %492 = vector.extract_strided_slice %485 {offsets = [0, 1], sizes = [14, 14], strides = [1, 1]} : vector<14x16xf32> to vector<14x14xf32>
    %493 = vector.broadcast %491 : f32 to vector<14x14xf32>
    %494 = arith.mulf %492, %493 : vector<14x14xf32>
    %495 = arith.addf %490, %494 : vector<14x14xf32>
    %c26_124 = arith.constant 26 : index
    %496 = memref.load %arg2[%c26_124] : memref<36xf32, #tpu.memory_space<smem>>
    %497 = vector.extract_strided_slice %485 {offsets = [0, 2], sizes = [14, 14], strides = [1, 1]} : vector<14x16xf32> to vector<14x14xf32>
    %498 = vector.broadcast %496 : f32 to vector<14x14xf32>
    %499 = arith.mulf %497, %498 : vector<14x14xf32>
    %500 = arith.addf %495, %499 : vector<14x14xf32>
    %c1_125 = arith.constant 1 : index
    %c3_126 = arith.constant 3 : index
    %c0_127 = arith.constant 0 : index
    %c0_128 = arith.constant 0 : index
    %501 = vector.load %arg1[%c1_125, %c3_126, %c0_127, %c0_128] : memref<2x4x16x16xf32, #tpu.memory_space<vmem>>, vector<1x1x16x16xf32>
    %502 = vector.shape_cast %501 : vector<1x1x16x16xf32> to vector<16x16xf32>
    %cst_129 = arith.constant 0.000000e+00 : f32
    %503 = vector.broadcast %cst_129 : f32 to vector<14x14xf32>
    %504 = vector.extract_strided_slice %502 {offsets = [0, 0], sizes = [14, 16], strides = [1, 1]} : vector<16x16xf32> to vector<14x16xf32>
    %c27_130 = arith.constant 27 : index
    %505 = memref.load %arg2[%c27_130] : memref<36xf32, #tpu.memory_space<smem>>
    %506 = vector.extract_strided_slice %504 {offsets = [0, 0], sizes = [14, 14], strides = [1, 1]} : vector<14x16xf32> to vector<14x14xf32>
    %507 = vector.broadcast %505 : f32 to vector<14x14xf32>
    %508 = arith.mulf %506, %507 : vector<14x14xf32>
    %509 = arith.addf %503, %508 : vector<14x14xf32>
    %c28_131 = arith.constant 28 : index
    %510 = memref.load %arg2[%c28_131] : memref<36xf32, #tpu.memory_space<smem>>
    %511 = vector.extract_strided_slice %504 {offsets = [0, 1], sizes = [14, 14], strides = [1, 1]} : vector<14x16xf32> to vector<14x14xf32>
    %512 = vector.broadcast %510 : f32 to vector<14x14xf32>
    %513 = arith.mulf %511, %512 : vector<14x14xf32>
    %514 = arith.addf %509, %513 : vector<14x14xf32>
    %c29_132 = arith.constant 29 : index
    %515 = memref.load %arg2[%c29_132] : memref<36xf32, #tpu.memory_space<smem>>
    %516 = vector.extract_strided_slice %504 {offsets = [0, 2], sizes = [14, 14], strides = [1, 1]} : vector<14x16xf32> to vector<14x14xf32>
    %517 = vector.broadcast %515 : f32 to vector<14x14xf32>
    %518 = arith.mulf %516, %517 : vector<14x14xf32>
    %519 = arith.addf %514, %518 : vector<14x14xf32>
    %520 = vector.extract_strided_slice %502 {offsets = [1, 0], sizes = [14, 16], strides = [1, 1]} : vector<16x16xf32> to vector<14x16xf32>
    %c30_133 = arith.constant 30 : index
    %521 = memref.load %arg2[%c30_133] : memref<36xf32, #tpu.memory_space<smem>>
    %522 = vector.extract_strided_slice %520 {offsets = [0, 0], sizes = [14, 14], strides = [1, 1]} : vector<14x16xf32> to vector<14x14xf32>
    %523 = vector.broadcast %521 : f32 to vector<14x14xf32>
    %524 = arith.mulf %522, %523 : vector<14x14xf32>
    %525 = arith.addf %519, %524 : vector<14x14xf32>
    %c31_134 = arith.constant 31 : index
    %526 = memref.load %arg2[%c31_134] : memref<36xf32, #tpu.memory_space<smem>>
    %527 = vector.extract_strided_slice %520 {offsets = [0, 1], sizes = [14, 14], strides = [1, 1]} : vector<14x16xf32> to vector<14x14xf32>
    %528 = vector.broadcast %526 : f32 to vector<14x14xf32>
    %529 = arith.mulf %527, %528 : vector<14x14xf32>
    %530 = arith.addf %525, %529 : vector<14x14xf32>
    %c32_135 = arith.constant 32 : index
    %531 = memref.load %arg2[%c32_135] : memref<36xf32, #tpu.memory_space<smem>>
    %532 = vector.extract_strided_slice %520 {offsets = [0, 2], sizes = [14, 14], strides = [1, 1]} : vector<14x16xf32> to vector<14x14xf32>
    %533 = vector.broadcast %531 : f32 to vector<14x14xf32>
    %534 = arith.mulf %532, %533 : vector<14x14xf32>
    %535 = arith.addf %530, %534 : vector<14x14xf32>
    %536 = vector.extract_strided_slice %502 {offsets = [2, 0], sizes = [14, 16], strides = [1, 1]} : vector<16x16xf32> to vector<14x16xf32>
    %c33_136 = arith.constant 33 : index
    %537 = memref.load %arg2[%c33_136] : memref<36xf32, #tpu.memory_space<smem>>
    %538 = vector.extract_strided_slice %536 {offsets = [0, 0], sizes = [14, 14], strides = [1, 1]} : vector<14x16xf32> to vector<14x14xf32>
    %539 = vector.broadcast %537 : f32 to vector<14x14xf32>
    %540 = arith.mulf %538, %539 : vector<14x14xf32>
    %541 = arith.addf %535, %540 : vector<14x14xf32>
    %c34_137 = arith.constant 34 : index
    %542 = memref.load %arg2[%c34_137] : memref<36xf32, #tpu.memory_space<smem>>
    %543 = vector.extract_strided_slice %536 {offsets = [0, 1], sizes = [14, 14], strides = [1, 1]} : vector<14x16xf32> to vector<14x14xf32>
    %544 = vector.broadcast %542 : f32 to vector<14x14xf32>
    %545 = arith.mulf %543, %544 : vector<14x14xf32>
    %546 = arith.addf %541, %545 : vector<14x14xf32>
    %c35_138 = arith.constant 35 : index
    %547 = memref.load %arg2[%c35_138] : memref<36xf32, #tpu.memory_space<smem>>
    %548 = vector.extract_strided_slice %536 {offsets = [0, 2], sizes = [14, 14], strides = [1, 1]} : vector<14x16xf32> to vector<14x14xf32>
    %549 = vector.broadcast %547 : f32 to vector<14x14xf32>
    %550 = arith.mulf %548, %549 : vector<14x14xf32>
    %551 = arith.addf %546, %550 : vector<14x14xf32>
    %c0_139 = arith.constant 0 : index
    %552 = memref.load %arg3[%c0_139] : memref<32xf32, #tpu.memory_space<smem>>
    %553 = vector.broadcast %552 : f32 to vector<14x14xf32>
    %554 = arith.mulf %398, %553 : vector<14x14xf32>
    %c1_140 = arith.constant 1 : index
    %555 = memref.load %arg3[%c1_140] : memref<32xf32, #tpu.memory_space<smem>>
    %556 = vector.broadcast %555 : f32 to vector<14x14xf32>
    %557 = arith.mulf %449, %556 : vector<14x14xf32>
    %558 = arith.addf %554, %557 : vector<14x14xf32>
    %c2_141 = arith.constant 2 : index
    %559 = memref.load %arg3[%c2_141] : memref<32xf32, #tpu.memory_space<smem>>
    %560 = vector.broadcast %559 : f32 to vector<14x14xf32>
    %561 = arith.mulf %500, %560 : vector<14x14xf32>
    %562 = arith.addf %558, %561 : vector<14x14xf32>
    %c3_142 = arith.constant 3 : index
    %563 = memref.load %arg3[%c3_142] : memref<32xf32, #tpu.memory_space<smem>>
    %564 = vector.broadcast %563 : f32 to vector<14x14xf32>
    %565 = arith.mulf %551, %564 : vector<14x14xf32>
    %566 = arith.addf %562, %565 : vector<14x14xf32>
    %c1_143 = arith.constant 1 : index
    %c0_144 = arith.constant 0 : index
    %c0_145 = arith.constant 0 : index
    %c0_146 = arith.constant 0 : index
    %567 = vector.load %arg4[%c1_143, %c0_144, %c0_145, %c0_146] : memref<2x8x14x14xf32, #tpu.memory_space<vmem>>, vector<1x1x14x14xf32>
    %568 = vector.shape_cast %567 : vector<1x1x14x14xf32> to vector<14x14xf32>
    %569 = vector.shape_cast %566 : vector<14x14xf32> to vector<1x1x14x14xf32>
    tpu.vector_store %arg4[%c1_143, %c0_144, %c0_145, %c0_146], %569 {strides = array<i32>} : memref<2x8x14x14xf32, #tpu.memory_space<vmem>>, vector<1x1x14x14xf32>,
    %c4_147 = arith.constant 4 : index
    %570 = memref.load %arg3[%c4_147] : memref<32xf32, #tpu.memory_space<smem>>
    %571 = vector.broadcast %570 : f32 to vector<14x14xf32>
    %572 = arith.mulf %398, %571 : vector<14x14xf32>
    %c5_148 = arith.constant 5 : index
    %573 = memref.load %arg3[%c5_148] : memref<32xf32, #tpu.memory_space<smem>>
    %574 = vector.broadcast %573 : f32 to vector<14x14xf32>
    %575 = arith.mulf %449, %574 : vector<14x14xf32>
    %576 = arith.addf %572, %575 : vector<14x14xf32>
    %c6_149 = arith.constant 6 : index
    %577 = memref.load %arg3[%c6_149] : memref<32xf32, #tpu.memory_space<smem>>
    %578 = vector.broadcast %577 : f32 to vector<14x14xf32>
    %579 = arith.mulf %500, %578 : vector<14x14xf32>
    %580 = arith.addf %576, %579 : vector<14x14xf32>
    %c7_150 = arith.constant 7 : index
    %581 = memref.load %arg3[%c7_150] : memref<32xf32, #tpu.memory_space<smem>>
    %582 = vector.broadcast %581 : f32 to vector<14x14xf32>
    %583 = arith.mulf %551, %582 : vector<14x14xf32>
    %584 = arith.addf %580, %583 : vector<14x14xf32>
    %c1_151 = arith.constant 1 : index
    %c1_152 = arith.constant 1 : index
    %c0_153 = arith.constant 0 : index
    %c0_154 = arith.constant 0 : index
    %585 = vector.load %arg4[%c1_151, %c1_152, %c0_153, %c0_154] : memref<2x8x14x14xf32, #tpu.memory_space<vmem>>, vector<1x1x14x14xf32>
    %586 = vector.shape_cast %585 : vector<1x1x14x14xf32> to vector<14x14xf32>
    %587 = vector.shape_cast %584 : vector<14x14xf32> to vector<1x1x14x14xf32>
    tpu.vector_store %arg4[%c1_151, %c1_152, %c0_153, %c0_154], %587 {strides = array<i32>} : memref<2x8x14x14xf32, #tpu.memory_space<vmem>>, vector<1x1x14x14xf32>,
    %c8_155 = arith.constant 8 : index
    %588 = memref.load %arg3[%c8_155] : memref<32xf32, #tpu.memory_space<smem>>
    %589 = vector.broadcast %588 : f32 to vector<14x14xf32>
    %590 = arith.mulf %398, %589 : vector<14x14xf32>
    %c9_156 = arith.constant 9 : index
    %591 = memref.load %arg3[%c9_156] : memref<32xf32, #tpu.memory_space<smem>>
    %592 = vector.broadcast %591 : f32 to vector<14x14xf32>
    %593 = arith.mulf %449, %592 : vector<14x14xf32>
    %594 = arith.addf %590, %593 : vector<14x14xf32>
    %c10_157 = arith.constant 10 : index
    %595 = memref.load %arg3[%c10_157] : memref<32xf32, #tpu.memory_space<smem>>
    %596 = vector.broadcast %595 : f32 to vector<14x14xf32>
    %597 = arith.mulf %500, %596 : vector<14x14xf32>
    %598 = arith.addf %594, %597 : vector<14x14xf32>
    %c11_158 = arith.constant 11 : index
    %599 = memref.load %arg3[%c11_158] : memref<32xf32, #tpu.memory_space<smem>>
    %600 = vector.broadcast %599 : f32 to vector<14x14xf32>
    %601 = arith.mulf %551, %600 : vector<14x14xf32>
    %602 = arith.addf %598, %601 : vector<14x14xf32>
    %c1_159 = arith.constant 1 : index
    %c2_160 = arith.constant 2 : index
    %c0_161 = arith.constant 0 : index
    %c0_162 = arith.constant 0 : index
    %603 = vector.load %arg4[%c1_159, %c2_160, %c0_161, %c0_162] : memref<2x8x14x14xf32, #tpu.memory_space<vmem>>, vector<1x1x14x14xf32>
    %604 = vector.shape_cast %603 : vector<1x1x14x14xf32> to vector<14x14xf32>
    %605 = vector.shape_cast %602 : vector<14x14xf32> to vector<1x1x14x14xf32>
    tpu.vector_store %arg4[%c1_159, %c2_160, %c0_161, %c0_162], %605 {strides = array<i32>} : memref<2x8x14x14xf32, #tpu.memory_space<vmem>>, vector<1x1x14x14xf32>,
    %c12_163 = arith.constant 12 : index
    %606 = memref.load %arg3[%c12_163] : memref<32xf32, #tpu.memory_space<smem>>
    %607 = vector.broadcast %606 : f32 to vector<14x14xf32>
    %608 = arith.mulf %398, %607 : vector<14x14xf32>
    %c13_164 = arith.constant 13 : index
    %609 = memref.load %arg3[%c13_164] : memref<32xf32, #tpu.memory_space<smem>>
    %610 = vector.broadcast %609 : f32 to vector<14x14xf32>
    %611 = arith.mulf %449, %610 : vector<14x14xf32>
    %612 = arith.addf %608, %611 : vector<14x14xf32>
    %c14_165 = arith.constant 14 : index
    %613 = memref.load %arg3[%c14_165] : memref<32xf32, #tpu.memory_space<smem>>
    %614 = vector.broadcast %613 : f32 to vector<14x14xf32>
    %615 = arith.mulf %500, %614 : vector<14x14xf32>
    %616 = arith.addf %612, %615 : vector<14x14xf32>
    %c15_166 = arith.constant 15 : index
    %617 = memref.load %arg3[%c15_166] : memref<32xf32, #tpu.memory_space<smem>>
    %618 = vector.broadcast %617 : f32 to vector<14x14xf32>
    %619 = arith.mulf %551, %618 : vector<14x14xf32>
    %620 = arith.addf %616, %619 : vector<14x14xf32>
    %c1_167 = arith.constant 1 : index
    %c3_168 = arith.constant 3 : index
    %c0_169 = arith.constant 0 : index
    %c0_170 = arith.constant 0 : index
    %621 = vector.load %arg4[%c1_167, %c3_168, %c0_169, %c0_170] : memref<2x8x14x14xf32, #tpu.memory_space<vmem>>, vector<1x1x14x14xf32>
    %622 = vector.shape_cast %621 : vector<1x1x14x14xf32> to vector<14x14xf32>
    %623 = vector.shape_cast %620 : vector<14x14xf32> to vector<1x1x14x14xf32>
    tpu.vector_store %arg4[%c1_167, %c3_168, %c0_169, %c0_170], %623 {strides = array<i32>} : memref<2x8x14x14xf32, #tpu.memory_space<vmem>>, vector<1x1x14x14xf32>,
    %c16_171 = arith.constant 16 : index
    %624 = memref.load %arg3[%c16_171] : memref<32xf32, #tpu.memory_space<smem>>
    %625 = vector.broadcast %624 : f32 to vector<14x14xf32>
    %626 = arith.mulf %398, %625 : vector<14x14xf32>
    %c17_172 = arith.constant 17 : index
    %627 = memref.load %arg3[%c17_172] : memref<32xf32, #tpu.memory_space<smem>>
    %628 = vector.broadcast %627 : f32 to vector<14x14xf32>
    %629 = arith.mulf %449, %628 : vector<14x14xf32>
    %630 = arith.addf %626, %629 : vector<14x14xf32>
    %c18_173 = arith.constant 18 : index
    %631 = memref.load %arg3[%c18_173] : memref<32xf32, #tpu.memory_space<smem>>
    %632 = vector.broadcast %631 : f32 to vector<14x14xf32>
    %633 = arith.mulf %500, %632 : vector<14x14xf32>
    %634 = arith.addf %630, %633 : vector<14x14xf32>
    %c19_174 = arith.constant 19 : index
    %635 = memref.load %arg3[%c19_174] : memref<32xf32, #tpu.memory_space<smem>>
    %636 = vector.broadcast %635 : f32 to vector<14x14xf32>
    %637 = arith.mulf %551, %636 : vector<14x14xf32>
    %638 = arith.addf %634, %637 : vector<14x14xf32>
    %c1_175 = arith.constant 1 : index
    %c4_176 = arith.constant 4 : index
    %c0_177 = arith.constant 0 : index
    %c0_178 = arith.constant 0 : index
    %639 = vector.load %arg4[%c1_175, %c4_176, %c0_177, %c0_178] : memref<2x8x14x14xf32, #tpu.memory_space<vmem>>, vector<1x1x14x14xf32>
    %640 = vector.shape_cast %639 : vector<1x1x14x14xf32> to vector<14x14xf32>
    %641 = vector.shape_cast %638 : vector<14x14xf32> to vector<1x1x14x14xf32>
    tpu.vector_store %arg4[%c1_175, %c4_176, %c0_177, %c0_178], %641 {strides = array<i32>} : memref<2x8x14x14xf32, #tpu.memory_space<vmem>>, vector<1x1x14x14xf32>,
    %c20_179 = arith.constant 20 : index
    %642 = memref.load %arg3[%c20_179] : memref<32xf32, #tpu.memory_space<smem>>
    %643 = vector.broadcast %642 : f32 to vector<14x14xf32>
    %644 = arith.mulf %398, %643 : vector<14x14xf32>
    %c21_180 = arith.constant 21 : index
    %645 = memref.load %arg3[%c21_180] : memref<32xf32, #tpu.memory_space<smem>>
    %646 = vector.broadcast %645 : f32 to vector<14x14xf32>
    %647 = arith.mulf %449, %646 : vector<14x14xf32>
    %648 = arith.addf %644, %647 : vector<14x14xf32>
    %c22_181 = arith.constant 22 : index
    %649 = memref.load %arg3[%c22_181] : memref<32xf32, #tpu.memory_space<smem>>
    %650 = vector.broadcast %649 : f32 to vector<14x14xf32>
    %651 = arith.mulf %500, %650 : vector<14x14xf32>
    %652 = arith.addf %648, %651 : vector<14x14xf32>
    %c23_182 = arith.constant 23 : index
    %653 = memref.load %arg3[%c23_182] : memref<32xf32, #tpu.memory_space<smem>>
    %654 = vector.broadcast %653 : f32 to vector<14x14xf32>
    %655 = arith.mulf %551, %654 : vector<14x14xf32>
    %656 = arith.addf %652, %655 : vector<14x14xf32>
    %c1_183 = arith.constant 1 : index
    %c5_184 = arith.constant 5 : index
    %c0_185 = arith.constant 0 : index
    %c0_186 = arith.constant 0 : index
    %657 = vector.load %arg4[%c1_183, %c5_184, %c0_185, %c0_186] : memref<2x8x14x14xf32, #tpu.memory_space<vmem>>, vector<1x1x14x14xf32>
    %658 = vector.shape_cast %657 : vector<1x1x14x14xf32> to vector<14x14xf32>
    %659 = vector.shape_cast %656 : vector<14x14xf32> to vector<1x1x14x14xf32>
    tpu.vector_store %arg4[%c1_183, %c5_184, %c0_185, %c0_186], %659 {strides = array<i32>} : memref<2x8x14x14xf32, #tpu.memory_space<vmem>>, vector<1x1x14x14xf32>,
    %c24_187 = arith.constant 24 : index
    %660 = memref.load %arg3[%c24_187] : memref<32xf32, #tpu.memory_space<smem>>
    %661 = vector.broadcast %660 : f32 to vector<14x14xf32>
    %662 = arith.mulf %398, %661 : vector<14x14xf32>
    %c25_188 = arith.constant 25 : index
    %663 = memref.load %arg3[%c25_188] : memref<32xf32, #tpu.memory_space<smem>>
    %664 = vector.broadcast %663 : f32 to vector<14x14xf32>
    %665 = arith.mulf %449, %664 : vector<14x14xf32>
    %666 = arith.addf %662, %665 : vector<14x14xf32>
    %c26_189 = arith.constant 26 : index
    %667 = memref.load %arg3[%c26_189] : memref<32xf32, #tpu.memory_space<smem>>
    %668 = vector.broadcast %667 : f32 to vector<14x14xf32>
    %669 = arith.mulf %500, %668 : vector<14x14xf32>
    %670 = arith.addf %666, %669 : vector<14x14xf32>
    %c27_190 = arith.constant 27 : index
    %671 = memref.load %arg3[%c27_190] : memref<32xf32, #tpu.memory_space<smem>>
    %672 = vector.broadcast %671 : f32 to vector<14x14xf32>
    %673 = arith.mulf %551, %672 : vector<14x14xf32>
    %674 = arith.addf %670, %673 : vector<14x14xf32>
    %c1_191 = arith.constant 1 : index
    %c6_192 = arith.constant 6 : index
    %c0_193 = arith.constant 0 : index
    %c0_194 = arith.constant 0 : index
    %675 = vector.load %arg4[%c1_191, %c6_192, %c0_193, %c0_194] : memref<2x8x14x14xf32, #tpu.memory_space<vmem>>, vector<1x1x14x14xf32>
    %676 = vector.shape_cast %675 : vector<1x1x14x14xf32> to vector<14x14xf32>
    %677 = vector.shape_cast %674 : vector<14x14xf32> to vector<1x1x14x14xf32>
    tpu.vector_store %arg4[%c1_191, %c6_192, %c0_193, %c0_194], %677 {strides = array<i32>} : memref<2x8x14x14xf32, #tpu.memory_space<vmem>>, vector<1x1x14x14xf32>,
    %c28_195 = arith.constant 28 : index
    %678 = memref.load %arg3[%c28_195] : memref<32xf32, #tpu.memory_space<smem>>
    %679 = vector.broadcast %678 : f32 to vector<14x14xf32>
    %680 = arith.mulf %398, %679 : vector<14x14xf32>
    %c29_196 = arith.constant 29 : index
    %681 = memref.load %arg3[%c29_196] : memref<32xf32, #tpu.memory_space<smem>>
    %682 = vector.broadcast %681 : f32 to vector<14x14xf32>
    %683 = arith.mulf %449, %682 : vector<14x14xf32>
    %684 = arith.addf %680, %683 : vector<14x14xf32>
    %c30_197 = arith.constant 30 : index
    %685 = memref.load %arg3[%c30_197] : memref<32xf32, #tpu.memory_space<smem>>
    %686 = vector.broadcast %685 : f32 to vector<14x14xf32>
    %687 = arith.mulf %500, %686 : vector<14x14xf32>
    %688 = arith.addf %684, %687 : vector<14x14xf32>
    %c31_198 = arith.constant 31 : index
    %689 = memref.load %arg3[%c31_198] : memref<32xf32, #tpu.memory_space<smem>>
    %690 = vector.broadcast %689 : f32 to vector<14x14xf32>
    %691 = arith.mulf %551, %690 : vector<14x14xf32>
    %692 = arith.addf %688, %691 : vector<14x14xf32>
    %c1_199 = arith.constant 1 : index
    %c7_200 = arith.constant 7 : index
    %c0_201 = arith.constant 0 : index
    %c0_202 = arith.constant 0 : index
    %693 = vector.load %arg4[%c1_199, %c7_200, %c0_201, %c0_202] : memref<2x8x14x14xf32, #tpu.memory_space<vmem>>, vector<1x1x14x14xf32>
    %694 = vector.shape_cast %693 : vector<1x1x14x14xf32> to vector<14x14xf32>
    %695 = vector.shape_cast %692 : vector<14x14xf32> to vector<1x1x14x14xf32>
    tpu.vector_store %arg4[%c1_199, %c7_200, %c0_201, %c0_202], %695 {strides = array<i32>} : memref<2x8x14x14xf32, #tpu.memory_space<vmem>>, vector<1x1x14x14xf32>,
    return
  }
  func.func @transform_0(%arg0: i32) -> (i32, i32, i32, i32) {
    %c0_i32 = arith.constant 0 : i32
    %c0_i32_0 = arith.constant 0 : i32
    %c0_i32_1 = arith.constant 0 : i32
    %c0_i32_2 = arith.constant 0 : i32
    return %arg0, %c0_i32, %c0_i32_0, %c0_i32_1 : i32, i32, i32, i32
  }
  func.func @transform_1(%arg0: i32) -> i32 {
    %c0_i32 = arith.constant 0 : i32
    %c0_i32_0 = arith.constant 0 : i32
    return %c0_i32 : i32
  }
  func.func @transform_2(%arg0: i32) -> i32 {
    %c0_i32 = arith.constant 0 : i32
    %c0_i32_0 = arith.constant 0 : i32
    return %c0_i32 : i32
  }
  func.func @transform_3(%arg0: i32) -> (i32, i32, i32, i32) {
    %c0_i32 = arith.constant 0 : i32
    %c0_i32_0 = arith.constant 0 : i32
    %c0_i32_1 = arith.constant 0 : i32
    %c0_i32_2 = arith.constant 0 : i32
    return %arg0, %c0_i32, %c0_i32_0, %c0_i32_1 : i32, i32, i32, i32
  }
}

</mosaic_0001>

<llo_original>
// kernel: tpu_custom_call.1
$region0: #{tpu_custom_call.1}
  #allocation0 [shape = 'u32[]', space=smem, size = 0x4, offset = 0x4, fixed_abs, tag = 'smem constant byte address 0x4 - core index']
  #allocation1 [shape = 'u32[144,128]{1,0:T(1,128)}', space=vmem, size = 0x12000, scoped, tag = 'internal scratch']
  %s0 = inlined_call_operand.hbm [shape: f32[2,4,16,16], index: 0, kind: input, shape index: {}]
  %s1 = inlined_call_operand.vmem [shape: f32[36], index: 1, kind: input, shape index: {}]
  %s2 = inlined_call_operand.vmem [shape: f32[32], index: 2, kind: input, shape index: {}]
  %s3 = inlined_call_operand.vmem [shape: f32[2,8,14,14], index: 3, kind: output, shape index: {}]
  %s4 = sld [smem:[#allocation0]]
  $region34: #{tpu_custom_call.1} parent=0
    _
  %s6 = ssub.s32 1, %s4
  %s7 = scalar_select 0, %s6, %s4
  $region1: #{tpu_custom_call.1} parent=0
    #allocation2 [shape = 'u8[65536]{0}', space=vmem, size = 0x10000, scoped, tag = 'input window, operand 0, single buffered']
    #allocation3 [shape = 's32[1]{0}', space=sflag, size = 0x4, scoped, tag = 'scoped memory for tpu_custom_call.1']
    #allocation4 [shape = 's32[1]{0}', space=sflag, size = 0x4, scoped, tag = 'scoped memory for tpu_custom_call.1']
    #allocation5 [shape = 'u8[512]{0}', space=smem, size = 0x200, scoped, tag = 'input window, operand 1, single buffered']
    #allocation6 [shape = 'u8[512]{0}', space=smem, size = 0x200, scoped, tag = 'input window, operand 2, single buffered']
    #allocation7 [shape = 's32[1]{0}', space=sflag, size = 0x4, scoped, tag = 'scoped memory for tpu_custom_call.1']
    %8 = vsyncpa [#allocation3], 0
    %9 = vsyncpa [#allocation4], 0
    %10 = vsyncpa [#allocation7], 0
    // Predicated region
    $region2: #{tpu_custom_call.1} parent=1 // pred_check
      _
    $region3: #{tpu_custom_call.1} parent=1 // pred_check_branch
      %12 = sbr.rel (0) target = $region5
    $region4: #{tpu_custom_call.1} parent=1 // pred_region
      %s14 = ssub.s32 2048, 2048
      %15 = vsyncadd [#allocation3], %s14
      %s16 = sshll.u32 [#allocation2], 4
      %s17 = int_to_ptr.vmem [resolvable:$true] %s16
      %22 = dma.hbm_to_vmem [thread:$0]  %s0, 2048, %s17, [#allocation3], 128, 128, 8
    $region5: #{tpu_custom_call.1} parent=1 // pred_fallthru
      _
    // Predicated region
    $region6: #{tpu_custom_call.1} parent=1 // pred_check
      _
    $region7: #{tpu_custom_call.1} parent=1 // pred_check_branch
      %24 = sbr.rel (0) target = $region9
    $region8: #{tpu_custom_call.1} parent=1 // pred_region
      %s26 = ssub.s32 16, 16
      %27 = vsyncadd [#allocation4], %s26
      %s29 = sshll.u32 %s1, 4
      %s30 = int_to_ptr.vmem [resolvable:$true] %s29
      %32 = dma.vmem_to_smem %s30, 16, [#allocation5], [#allocation4]
    $region9: #{tpu_custom_call.1} parent=1 // pred_fallthru
      _
    // Predicated region
    $region10: #{tpu_custom_call.1} parent=1 // pred_check
      _
    $region11: #{tpu_custom_call.1} parent=1 // pred_check_branch
      %34 = sbr.rel (0) target = $region13
    $region12: #{tpu_custom_call.1} parent=1 // pred_region
      %s36 = ssub.s32 16, 16
      %37 = vsyncadd [#allocation7], %s36
      %s39 = sshll.u32 %s2, 4
      %s40 = int_to_ptr.vmem [resolvable:$true] %s39
      %42 = dma.vmem_to_smem %s40, 16, [#allocation6], [#allocation7]
    $region13: #{tpu_custom_call.1} parent=1 // pred_fallthru
      _
    // Predicated region
    $region14: #{tpu_custom_call.1} parent=1 // pred_check
      _
    $region15: #{tpu_custom_call.1} parent=1 // pred_check_branch
      %44 = sbr.rel (0) target = $region17
    $region16: #{tpu_custom_call.1} parent=1 // pred_region
      %45 = dma.done [#allocation3], 2048
    $region17: #{tpu_custom_call.1} parent=1 // pred_fallthru
      _
    // Predicated region
    $region18: #{tpu_custom_call.1} parent=1 // pred_check
      _
    $region19: #{tpu_custom_call.1} parent=1 // pred_check_branch
      %47 = sbr.rel (0) target = $region21
    $region20: #{tpu_custom_call.1} parent=1 // pred_region
      %48 = dma.done [#allocation4], 16
    $region21: #{tpu_custom_call.1} parent=1 // pred_fallthru
      _
    // Predicated region
    $region22: #{tpu_custom_call.1} parent=1 // pred_check
      _
    $region23: #{tpu_custom_call.1} parent=1 // pred_check_branch
      %50 = sbr.rel (0) target = $region25
    $region24: #{tpu_custom_call.1} parent=1 // pred_region
      %51 = dma.done [#allocation7], 16
    $region25: #{tpu_custom_call.1} parent=1 // pred_fallthru
      _
    %52 = sfence
    %v53 = vld [vmem:[#allocation2] sm:$0xff]
    %v54 = vld [vmem:[#allocation2 + $0x8] sm:$0xff]
    %s55 = sld [smem:[#allocation5]]
    %v56 = vstv %s55
    %v57 = vmul.f32 %v53, %v56
    %v58 = vmul.f32 %v54, %v56
    %v59 = vadd.f32 %v57, 0.0
    %v60 = vadd.f32 %v58, 0.0
    %s61 = sld [smem:[#allocation5 + $0x1]]
    %v62 = vstv %s61
    %v63 = vmul.f32 %v53, %v62
    %v64 = vmul.f32 %v54, %v62
    %67 = vrot.lane.b32.xlu0 %v63, 127
    %v68 = vpop.permute.xlu0 %67
    %69 = vrot.lane.b32.xlu0 %v64, 127
    %v70 = vpop.permute.xlu0 %69
    %v73 = vadd.f32 %v59, %v68
    %v74 = vadd.f32 %v60, %v70
    %s75 = sld [smem:[#allocation5 + $0x2]]
    %v76 = vstv %s75
    %v77 = vmul.f32 %v53, %v76
    %v78 = vmul.f32 %v54, %v76
    %81 = vrot.lane.b32.xlu0 %v77, 126
    %v82 = vpop.permute.xlu0 %81
    %83 = vrot.lane.b32.xlu0 %v78, 126
    %v84 = vpop.permute.xlu0 %83
    %v87 = vadd.f32 %v73, %v82
    %v88 = vadd.f32 %v74, %v84
    %s89 = sld [smem:[#allocation5 + $0x3]]
    %v90 = vstv %s89
    %v91 = vmul.f32 %v53, %v90
    %v92 = vmul.f32 %v54, %v90
    %vm95 = vcmask 1046528
    %v96 = vrot.slane %v91, 1
    %v97 = vrot.slane %v92, 1
    %v98 = vsel %vm95, %v96, %v97
    %v101 = vadd.f32 %v87, %v98
    %v102 = vadd.f32 %v88, %v97
    %s103 = sld [smem:[#allocation5 + $0x4]]
    %v104 = vstv %s103
    %v105 = vmul.f32 %v53, %v104
    %v106 = vmul.f32 %v54, %v104
    %v109 = vrot.slane %v105, 1
    %v110 = vrot.slane %v106, 1
    %v111 = vsel %vm95, %v109, %v110
    %112 = vrot.lane.b32.xlu0 %v111, 127
    %v113 = vpop.permute.xlu0 %112
    %114 = vrot.lane.b32.xlu0 %v110, 127
    %v115 = vpop.permute.xlu0 %114
    %v118 = vadd.f32 %v101, %v113
    %v119 = vadd.f32 %v102, %v115
    %s120 = sld [smem:[#allocation5 + $0x5]]
    %v121 = vstv %s120
    %v122 = vmul.f32 %v53, %v121
    %v123 = vmul.f32 %v54, %v121
    %v126 = vrot.slane %v122, 1
    %v127 = vrot.slane %v123, 1
    %v128 = vsel %vm95, %v126, %v127
    %129 = vrot.lane.b32.xlu0 %v128, 126
    %v130 = vpop.permute.xlu0 %129
    %131 = vrot.lane.b32.xlu0 %v127, 126
    %v132 = vpop.permute.xlu0 %131
    %v135 = vadd.f32 %v118, %v130
    %v136 = vadd.f32 %v119, %v132
    %s137 = sld [smem:[#allocation5 + $0x6]]
    %v138 = vstv %s137
    %v139 = vmul.f32 %v53, %v138
    %v140 = vmul.f32 %v54, %v138
    %vm143 = vcmask 1045504
    %v144 = vrot.slane %v139, 2
    %v145 = vrot.slane %v140, 2
    %v146 = vsel %vm143, %v144, %v145
    %v149 = vadd.f32 %v135, %v146
    %v150 = vadd.f32 %v136, %v145
    %s151 = sld [smem:[#allocation5 + $0x7]]
    %v152 = vstv %s151
    %v153 = vmul.f32 %v53, %v152
    %v154 = vmul.f32 %v54, %v152
    %v157 = vrot.slane %v153, 2
    %v158 = vrot.slane %v154, 2
    %v159 = vsel %vm143, %v157, %v158
    %160 = vrot.lane.b32.xlu0 %v159, 127
    %v161 = vpop.permute.xlu0 %160
    %162 = vrot.lane.b32.xlu0 %v158, 127
    %v163 = vpop.permute.xlu0 %162
    %v166 = vadd.f32 %v149, %v161
    %v167 = vadd.f32 %v150, %v163
    %s168 = sld [smem:[#allocation5 + $0x8]]
    %v169 = vstv %s168
    %v170 = vmul.f32 %v53, %v169
    %v171 = vmul.f32 %v54, %v169
    %v174 = vrot.slane %v170, 2
    %v175 = vrot.slane %v171, 2
    %v176 = vsel %vm143, %v174, %v175
    %177 = vrot.lane.b32.xlu0 %v176, 126
    %v178 = vpop.permute.xlu0 %177
    %179 = vrot.lane.b32.xlu0 %v175, 126
    %v180 = vpop.permute.xlu0 %179
    %v183 = vadd.f32 %v166, %v178
    %v184 = vadd.f32 %v167, %v180
    %s185 = scalar_lea.vmem [#allocation2], 16
    %v186 = vld [vmem:[%s185] sm:$0xff]
    %v187 = vld [vmem:[%s185 + $0x8] sm:$0xff]
    %s188 = sld [smem:[#allocation5 + $0x9]]
    %v189 = vstv %s188
    %v190 = vmul.f32 %v186, %v189
    %v191 = vmul.f32 %v187, %v189
    %v192 = vadd.f32 %v190, 0.0
    %v193 = vadd.f32 %v191, 0.0
    %s194 = sld [smem:[#allocation5 + $0xa]]
    %v195 = vstv %s194
    %v196 = vmul.f32 %v186, %v195
    %v197 = vmul.f32 %v187, %v195
    %200 = vrot.lane.b32.xlu0 %v196, 127
    %v201 = vpop.permute.xlu0 %200
    %202 = vrot.lane.b32.xlu0 %v197, 127
    %v203 = vpop.permute.xlu0 %202
    %v206 = vadd.f32 %v192, %v201
    %v207 = vadd.f32 %v193, %v203
    %s208 = sld [smem:[#allocation5 + $0xb]]
    %v209 = vstv %s208
    %v210 = vmul.f32 %v186, %v209
    %v211 = vmul.f32 %v187, %v209
    %214 = vrot.lane.b32.xlu0 %v210, 126
    %v215 = vpop.permute.xlu0 %214
    %216 = vrot.lane.b32.xlu0 %v211, 126
    %v217 = vpop.permute.xlu0 %216
    %v220 = vadd.f32 %v206, %v215
    %v221 = vadd.f32 %v207, %v217
    %s222 = sld [smem:[#allocation5 + $0xc]]
    %v223 = vstv %s222
    %v224 = vmul.f32 %v186, %v223
    %v225 = vmul.f32 %v187, %v223
    %v228 = vrot.slane %v224, 1
    %v229 = vrot.slane %v225, 1
    %v230 = vsel %vm95, %v228, %v229
    %v233 = vadd.f32 %v220, %v230
    %v234 = vadd.f32 %v221, %v229
    %s235 = sld [smem:[#allocation5 + $0xd]]
    %v236 = vstv %s235
    %v237 = vmul.f32 %v186, %v236
    %v238 = vmul.f32 %v187, %v236
    %v241 = vrot.slane %v237, 1
    %v242 = vrot.slane %v238, 1
    %v243 = vsel %vm95, %v241, %v242
    %244 = vrot.lane.b32.xlu0 %v243, 127
    %v245 = vpop.permute.xlu0 %244
    %246 = vrot.lane.b32.xlu0 %v242, 127
    %v247 = vpop.permute.xlu0 %246
    %v250 = vadd.f32 %v233, %v245
    %v251 = vadd.f32 %v234, %v247
    %s252 = sld [smem:[#allocation5 + $0xe]]
    %v253 = vstv %s252
    %v254 = vmul.f32 %v186, %v253
    %v255 = vmul.f32 %v187, %v253
    %v258 = vrot.slane %v254, 1
    %v259 = vrot.slane %v255, 1
    %v260 = vsel %vm95, %v258, %v259
    %261 = vrot.lane.b32.xlu0 %v260, 126
    %v262 = vpop.permute.xlu0 %261
    %263 = vrot.lane.b32.xlu0 %v259, 126
    %v264 = vpop.permute.xlu0 %263
    %v267 = vadd.f32 %v250, %v262
    %v268 = vadd.f32 %v251, %v264
    %s269 = sld [smem:[#allocation5 + $0xf]]
    %v270 = vstv %s269
    %v271 = vmul.f32 %v186, %v270
    %v272 = vmul.f32 %v187, %v270
    %v275 = vrot.slane %v271, 2
    %v276 = vrot.slane %v272, 2
    %v277 = vsel %vm143, %v275, %v276
    %v280 = vadd.f32 %v267, %v277
    %v281 = vadd.f32 %v268, %v276
    %s282 = sld [smem:[#allocation5 + $0x10]]
    %v283 = vstv %s282
    %v284 = vmul.f32 %v186, %v283
    %v285 = vmul.f32 %v187, %v283
    %v288 = vrot.slane %v284, 2
    %v289 = vrot.slane %v285, 2
    %v290 = vsel %vm143, %v288, %v289
    %291 = vrot.lane.b32.xlu0 %v290, 127
    %v292 = vpop.permute.xlu0 %291
    %293 = vrot.lane.b32.xlu0 %v289, 127
    %v294 = vpop.permute.xlu0 %293
    %v297 = vadd.f32 %v280, %v292
    %v298 = vadd.f32 %v281, %v294
    %s299 = sld [smem:[#allocation5 + $0x11]]
    %v300 = vstv %s299
    %v301 = vmul.f32 %v186, %v300
    %v302 = vmul.f32 %v187, %v300
    %v305 = vrot.slane %v301, 2
    %v306 = vrot.slane %v302, 2
    %v307 = vsel %vm143, %v305, %v306
    %308 = vrot.lane.b32.xlu0 %v307, 126
    %v309 = vpop.permute.xlu0 %308
    %310 = vrot.lane.b32.xlu0 %v306, 126
    %v311 = vpop.permute.xlu0 %310
    %v314 = vadd.f32 %v297, %v309
    %v315 = vadd.f32 %v298, %v311
    %s316 = scalar_lea.vmem [#allocation2], 32
    %v317 = vld [vmem:[%s316] sm:$0xff]
    %v318 = vld [vmem:[%s316 + $0x8] sm:$0xff]
    %s319 = sld [smem:[#allocation5 + $0x12]]
    %v320 = vstv %s319
    %v321 = vmul.f32 %v317, %v320
    %v322 = vmul.f32 %v318, %v320
    %v323 = vadd.f32 %v321, 0.0
    %v324 = vadd.f32 %v322, 0.0
    %s325 = sld [smem:[#allocation5 + $0x13]]
    %v326 = vstv %s325
    %v327 = vmul.f32 %v317, %v326
    %v328 = vmul.f32 %v318, %v326
    %331 = vrot.lane.b32.xlu0 %v327, 127
    %v332 = vpop.permute.xlu0 %331
    %333 = vrot.lane.b32.xlu0 %v328, 127
    %v334 = vpop.permute.xlu0 %333
    %v337 = vadd.f32 %v323, %v332
    %v338 = vadd.f32 %v324, %v334
    %s339 = sld [smem:[#allocation5 + $0x14]]
    %v340 = vstv %s339
    %v341 = vmul.f32 %v317, %v340
    %v342 = vmul.f32 %v318, %v340
    %345 = vrot.lane.b32.xlu0 %v341, 126
    %v346 = vpop.permute.xlu0 %345
    %347 = vrot.lane.b32.xlu0 %v342, 126
    %v348 = vpop.permute.xlu0 %347
    %v351 = vadd.f32 %v337, %v346
    %v352 = vadd.f32 %v338, %v348
    %s353 = sld [smem:[#allocation5 + $0x15]]
    %v354 = vstv %s353
    %v355 = vmul.f32 %v317, %v354
    %v356 = vmul.f32 %v318, %v354
    %v359 = vrot.slane %v355, 1
    %v360 = vrot.slane %v356, 1
    %v361 = vsel %vm95, %v359, %v360
    %v364 = vadd.f32 %v351, %v361
    %v365 = vadd.f32 %v352, %v360
    %s366 = sld [smem:[#allocation5 + $0x16]]
    %v367 = vstv %s366
    %v368 = vmul.f32 %v317, %v367
    %v369 = vmul.f32 %v318, %v367
    %v372 = vrot.slane %v368, 1
    %v373 = vrot.slane %v369, 1
    %v374 = vsel %vm95, %v372, %v373
    %375 = vrot.lane.b32.xlu0 %v374, 127
    %v376 = vpop.permute.xlu0 %375
    %377 = vrot.lane.b32.xlu0 %v373, 127
    %v378 = vpop.permute.xlu0 %377
    %v381 = vadd.f32 %v364, %v376
    %v382 = vadd.f32 %v365, %v378
    %s383 = sld [smem:[#allocation5 + $0x17]]
    %v384 = vstv %s383
    %v385 = vmul.f32 %v317, %v384
    %v386 = vmul.f32 %v318, %v384
    %v389 = vrot.slane %v385, 1
    %v390 = vrot.slane %v386, 1
    %v391 = vsel %vm95, %v389, %v390
    %392 = vrot.lane.b32.xlu0 %v391, 126
    %v393 = vpop.permute.xlu0 %392
    %394 = vrot.lane.b32.xlu0 %v390, 126
    %v395 = vpop.permute.xlu0 %394
    %v398 = vadd.f32 %v381, %v393
    %v399 = vadd.f32 %v382, %v395
    %s400 = sld [smem:[#allocation5 + $0x18]]
    %v401 = vstv %s400
    %v402 = vmul.f32 %v317, %v401
    %v403 = vmul.f32 %v318, %v401
    %v406 = vrot.slane %v402, 2
    %v407 = vrot.slane %v403, 2
    %v408 = vsel %vm143, %v406, %v407
    %v411 = vadd.f32 %v398, %v408
    %v412 = vadd.f32 %v399, %v407
    %s413 = sld [smem:[#allocation5 + $0x19]]
    %v414 = vstv %s413
    %v415 = vmul.f32 %v317, %v414
    %v416 = vmul.f32 %v318, %v414
    %v419 = vrot.slane %v415, 2
    %v420 = vrot.slane %v416, 2
    %v421 = vsel %vm143, %v419, %v420
    %422 = vrot.lane.b32.xlu0 %v421, 127
    %v423 = vpop.permute.xlu0 %422
    %424 = vrot.lane.b32.xlu0 %v420, 127
    %v425 = vpop.permute.xlu0 %424
    %v428 = vadd.f32 %v411, %v423
    %v429 = vadd.f32 %v412, %v425
    %s430 = sld [smem:[#allocation5 + $0x1a]]
    %v431 = vstv %s430
    %v432 = vmul.f32 %v317, %v431
    %v433 = vmul.f32 %v318, %v431
    %v436 = vrot.slane %v432, 2
    %v437 = vrot.slane %v433, 2
    %v438 = vsel %vm143, %v436, %v437
    %439 = vrot.lane.b32.xlu0 %v438, 126
    %v440 = vpop.permute.xlu0 %439
    %441 = vrot.lane.b32.xlu0 %v437, 126
    %v442 = vpop.permute.xlu0 %441
    %v445 = vadd.f32 %v428, %v440
    %v446 = vadd.f32 %v429, %v442
    %s447 = scalar_lea.vmem [#allocation2], 48
    %v448 = vld [vmem:[%s447] sm:$0xff]
    %v449 = vld [vmem:[%s447 + $0x8] sm:$0xff]
    %s450 = sld [smem:[#allocation5 + $0x1b]]
    %v451 = vstv %s450
    %v452 = vmul.f32 %v448, %v451
    %v453 = vmul.f32 %v449, %v451
    %v454 = vadd.f32 %v452, 0.0
    %v455 = vadd.f32 %v453, 0.0
    %s456 = sld [smem:[#allocation5 + $0x1c]]
    %v457 = vstv %s456
    %v458 = vmul.f32 %v448, %v457
    %v459 = vmul.f32 %v449, %v457
    %462 = vrot.lane.b32.xlu0 %v458, 127
    %v463 = vpop.permute.xlu0 %462
    %464 = vrot.lane.b32.xlu0 %v459, 127
    %v465 = vpop.permute.xlu0 %464
    %v468 = vadd.f32 %v454, %v463
    %v469 = vadd.f32 %v455, %v465
    %s470 = sld [smem:[#allocation5 + $0x1d]]
    %v471 = vstv %s470
    %v472 = vmul.f32 %v448, %v471
    %v473 = vmul.f32 %v449, %v471
    %476 = vrot.lane.b32.xlu0 %v472, 126
    %v477 = vpop.permute.xlu0 %476
    %478 = vrot.lane.b32.xlu0 %v473, 126
    %v479 = vpop.permute.xlu0 %478
    %v482 = vadd.f32 %v468, %v477
    %v483 = vadd.f32 %v469, %v479
    %s484 = sld [smem:[#allocation5 + $0x1e]]
    %v485 = vstv %s484
    %v486 = vmul.f32 %v448, %v485
    %v487 = vmul.f32 %v449, %v485
    %v490 = vrot.slane %v486, 1
    %v491 = vrot.slane %v487, 1
    %v492 = vsel %vm95, %v490, %v491
    %v495 = vadd.f32 %v482, %v492
    %v496 = vadd.f32 %v483, %v491
    %s497 = sld [smem:[#allocation5 + $0x1f]]
    %v498 = vstv %s497
    %v499 = vmul.f32 %v448, %v498
    %v500 = vmul.f32 %v449, %v498
    %v503 = vrot.slane %v499, 1
    %v504 = vrot.slane %v500, 1
    %v505 = vsel %vm95, %v503, %v504
    %506 = vrot.lane.b32.xlu0 %v505, 127
    %v507 = vpop.permute.xlu0 %506
    %508 = vrot.lane.b32.xlu0 %v504, 127
    %v509 = vpop.permute.xlu0 %508
    %v512 = vadd.f32 %v495, %v507
    %v513 = vadd.f32 %v496, %v509
    %s514 = sld [smem:[#allocation5 + $0x20]]
    %v515 = vstv %s514
    %v516 = vmul.f32 %v448, %v515
    %v517 = vmul.f32 %v449, %v515
    %v520 = vrot.slane %v516, 1
    %v521 = vrot.slane %v517, 1
    %v522 = vsel %vm95, %v520, %v521
    %523 = vrot.lane.b32.xlu0 %v522, 126
    %v524 = vpop.permute.xlu0 %523
    %525 = vrot.lane.b32.xlu0 %v521, 126
    %v526 = vpop.permute.xlu0 %525
    %v529 = vadd.f32 %v512, %v524
    %v530 = vadd.f32 %v513, %v526
    %s531 = sld [smem:[#allocation5 + $0x21]]
    %v532 = vstv %s531
    %v533 = vmul.f32 %v448, %v532
    %v534 = vmul.f32 %v449, %v532
    %v537 = vrot.slane %v533, 2
    %v538 = vrot.slane %v534, 2
    %v539 = vsel %vm143, %v537, %v538
    %v542 = vadd.f32 %v529, %v539
    %v543 = vadd.f32 %v530, %v538
    %s544 = sld [smem:[#allocation5 + $0x22]]
    %v545 = vstv %s544
    %v546 = vmul.f32 %v448, %v545
    %v547 = vmul.f32 %v449, %v545
    %v550 = vrot.slane %v546, 2
    %v551 = vrot.slane %v547, 2
    %v552 = vsel %vm143, %v550, %v551
    %553 = vrot.lane.b32.xlu0 %v552, 127
    %v554 = vpop.permute.xlu0 %553
    %555 = vrot.lane.b32.xlu0 %v551, 127
    %v556 = vpop.permute.xlu0 %555
    %v559 = vadd.f32 %v542, %v554
    %v560 = vadd.f32 %v543, %v556
    %s561 = sld [smem:[#allocation5 + $0x23]]
    %v562 = vstv %s561
    %v563 = vmul.f32 %v448, %v562
    %v564 = vmul.f32 %v449, %v562
    %v567 = vrot.slane %v563, 2
    %v568 = vrot.slane %v564, 2
    %v569 = vsel %vm143, %v567, %v568
    %570 = vrot.lane.b32.xlu0 %v569, 126
    %v571 = vpop.permute.xlu0 %570
    %572 = vrot.lane.b32.xlu0 %v568, 126
    %v573 = vpop.permute.xlu0 %572
    %v576 = vadd.f32 %v559, %v571
    %v577 = vadd.f32 %v560, %v573
    %s578 = sld [smem:[#allocation6]]
    %v579 = vstv %s578
    %v580 = vmul.f32 %v183, %v579
    %v581 = vmul.f32 %v184, %v579
    %s582 = sld [smem:[#allocation6 + $0x1]]
    %v583 = vstv %s582
    %v584 = vmul.f32 %v314, %v583
    %v585 = vmul.f32 %v315, %v583
    %v586 = vadd.f32 %v580, %v584
    %v587 = vadd.f32 %v581, %v585
    %s588 = sld [smem:[#allocation6 + $0x2]]
    %v589 = vstv %s588
    %v590 = vmul.f32 %v445, %v589
    %v591 = vmul.f32 %v446, %v589
    %v592 = vadd.f32 %v586, %v590
    %v593 = vadd.f32 %v587, %v591
    %s594 = sld [smem:[#allocation6 + $0x3]]
    %v595 = vstv %s594
    %v596 = vmul.f32 %v576, %v595
    %v597 = vmul.f32 %v577, %v595
    %v598 = vadd.f32 %v592, %v596
    %v599 = vadd.f32 %v593, %v597
    %vm600 = vcmask 113664
    %601 = vst.msk [vmem:[%s3] sm:$0xff] %vm600, %v598
    %vm602 = vcmask 111616
    %603 = vst.msk [vmem:[%s3 + $0x8] sm:$0x3f] %vm602, %v599
    %s604 = sld [smem:[#allocation6 + $0x4]]
    %v605 = vstv %s604
    %v606 = vmul.f32 %v183, %v605
    %v607 = vmul.f32 %v184, %v605
    %s608 = sld [smem:[#allocation6 + $0x5]]
    %v609 = vstv %s608
    %v610 = vmul.f32 %v314, %v609
    %v611 = vmul.f32 %v315, %v609
    %v612 = vadd.f32 %v606, %v610
    %v613 = vadd.f32 %v607, %v611
    %s614 = sld [smem:[#allocation6 + $0x6]]
    %v615 = vstv %s614
    %v616 = vmul.f32 %v445, %v615
    %v617 = vmul.f32 %v446, %v615
    %v618 = vadd.f32 %v612, %v616
    %v619 = vadd.f32 %v613, %v617
    %s620 = sld [smem:[#allocation6 + $0x7]]
    %v621 = vstv %s620
    %v622 = vmul.f32 %v576, %v621
    %v623 = vmul.f32 %v577, %v621
    %v624 = vadd.f32 %v618, %v622
    %v625 = vadd.f32 %v619, %v623
    %s626 = scalar_lea.vmem %s3, 16
    %627 = vst.msk [vmem:[%s626] sm:$0xff] %vm600, %v624
    %628 = vst.msk [vmem:[%s626 + $0x8] sm:$0x3f] %vm602, %v625
    %s629 = sld [smem:[#allocation6 + $0x8]]
    %v630 = vstv %s629
    %v631 = vmul.f32 %v183, %v630
    %v632 = vmul.f32 %v184, %v630
    %s633 = sld [smem:[#allocation6 + $0x9]]
    %v634 = vstv %s633
    %v635 = vmul.f32 %v314, %v634
    %v636 = vmul.f32 %v315, %v634
    %v637 = vadd.f32 %v631, %v635
    %v638 = vadd.f32 %v632, %v636
    %s639 = sld [smem:[#allocation6 + $0xa]]
    %v640 = vstv %s639
    %v641 = vmul.f32 %v445, %v640
    %v642 = vmul.f32 %v446, %v640
    %v643 = vadd.f32 %v637, %v641
    %v644 = vadd.f32 %v638, %v642
    %s645 = sld [smem:[#allocation6 + $0xb]]
    %v646 = vstv %s645
    %v647 = vmul.f32 %v576, %v646
    %v648 = vmul.f32 %v577, %v646
    %v649 = vadd.f32 %v643, %v647
    %v650 = vadd.f32 %v644, %v648
    %s651 = scalar_lea.vmem %s3, 32
    %652 = vst.msk [vmem:[%s651] sm:$0xff] %vm600, %v649
    %653 = vst.msk [vmem:[%s651 + $0x8] sm:$0x3f] %vm602, %v650
    %s654 = sld [smem:[#allocation6 + $0xc]]
    %v655 = vstv %s654
    %v656 = vmul.f32 %v183, %v655
    %v657 = vmul.f32 %v184, %v655
    %s658 = sld [smem:[#allocation6 + $0xd]]
    %v659 = vstv %s658
    %v660 = vmul.f32 %v314, %v659
    %v661 = vmul.f32 %v315, %v659
    %v662 = vadd.f32 %v656, %v660
    %v663 = vadd.f32 %v657, %v661
    %s664 = sld [smem:[#allocation6 + $0xe]]
    %v665 = vstv %s664
    %v666 = vmul.f32 %v445, %v665
    %v667 = vmul.f32 %v446, %v665
    %v668 = vadd.f32 %v662, %v666
    %v669 = vadd.f32 %v663, %v667
    %s670 = sld [smem:[#allocation6 + $0xf]]
    %v671 = vstv %s670
    %v672 = vmul.f32 %v576, %v671
    %v673 = vmul.f32 %v577, %v671
    %v674 = vadd.f32 %v668, %v672
    %v675 = vadd.f32 %v669, %v673
    %s676 = scalar_lea.vmem %s3, 48
    %677 = vst.msk [vmem:[%s676] sm:$0xff] %vm600, %v674
    %678 = vst.msk [vmem:[%s676 + $0x8] sm:$0x3f] %vm602, %v675
    %s679 = sld [smem:[#allocation6 + $0x10]]
    %v680 = vstv %s679
    %v681 = vmul.f32 %v183, %v680
    %v682 = vmul.f32 %v184, %v680
    %s683 = sld [smem:[#allocation6 + $0x11]]
    %v684 = vstv %s683
    %v685 = vmul.f32 %v314, %v684
    %v686 = vmul.f32 %v315, %v684
    %v687 = vadd.f32 %v681, %v685
    %v688 = vadd.f32 %v682, %v686
    %s689 = sld [smem:[#allocation6 + $0x12]]
    %v690 = vstv %s689
    %v691 = vmul.f32 %v445, %v690
    %v692 = vmul.f32 %v446, %v690
    %v693 = vadd.f32 %v687, %v691
    %v694 = vadd.f32 %v688, %v692
    %s695 = sld [smem:[#allocation6 + $0x13]]
    %v696 = vstv %s695
    %v697 = vmul.f32 %v576, %v696
    %v698 = vmul.f32 %v577, %v696
    %v699 = vadd.f32 %v693, %v697
    %v700 = vadd.f32 %v694, %v698
    %s701 = scalar_lea.vmem %s3, 64
    %702 = vst.msk [vmem:[%s701] sm:$0xff] %vm600, %v699
    %703 = vst.msk [vmem:[%s701 + $0x8] sm:$0x3f] %vm602, %v700
    %s704 = sld [smem:[#allocation6 + $0x14]]
    %v705 = vstv %s704
    %v706 = vmul.f32 %v183, %v705
    %v707 = vmul.f32 %v184, %v705
    %s708 = sld [smem:[#allocation6 + $0x15]]
    %v709 = vstv %s708
    %v710 = vmul.f32 %v314, %v709
    %v711 = vmul.f32 %v315, %v709
    %v712 = vadd.f32 %v706, %v710
    %v713 = vadd.f32 %v707, %v711
    %s714 = sld [smem:[#allocation6 + $0x16]]
    %v715 = vstv %s714
    %v716 = vmul.f32 %v445, %v715
    %v717 = vmul.f32 %v446, %v715
    %v718 = vadd.f32 %v712, %v716
    %v719 = vadd.f32 %v713, %v717
    %s720 = sld [smem:[#allocation6 + $0x17]]
    %v721 = vstv %s720
    %v722 = vmul.f32 %v576, %v721
    %v723 = vmul.f32 %v577, %v721
    %v724 = vadd.f32 %v718, %v722
    %v725 = vadd.f32 %v719, %v723
    %s726 = scalar_lea.vmem %s3, 80
    %727 = vst.msk [vmem:[%s726] sm:$0xff] %vm600, %v724
    %728 = vst.msk [vmem:[%s726 + $0x8] sm:$0x3f] %vm602, %v725
    %s729 = sld [smem:[#allocation6 + $0x18]]
    %v730 = vstv %s729
    %v731 = vmul.f32 %v183, %v730
    %v732 = vmul.f32 %v184, %v730
    %s733 = sld [smem:[#allocation6 + $0x19]]
    %v734 = vstv %s733
    %v735 = vmul.f32 %v314, %v734
    %v736 = vmul.f32 %v315, %v734
    %v737 = vadd.f32 %v731, %v735
    %v738 = vadd.f32 %v732, %v736
    %s739 = sld [smem:[#allocation6 + $0x1a]]
    %v740 = vstv %s739
    %v741 = vmul.f32 %v445, %v740
    %v742 = vmul.f32 %v446, %v740
    %v743 = vadd.f32 %v737, %v741
    %v744 = vadd.f32 %v738, %v742
    %s745 = sld [smem:[#allocation6 + $0x1b]]
    %v746 = vstv %s745
    %v747 = vmul.f32 %v576, %v746
    %v748 = vmul.f32 %v577, %v746
    %v749 = vadd.f32 %v743, %v747
    %v750 = vadd.f32 %v744, %v748
    %s751 = scalar_lea.vmem %s3, 96
    %752 = vst.msk [vmem:[%s751] sm:$0xff] %vm600, %v749
    %753 = vst.msk [vmem:[%s751 + $0x8] sm:$0x3f] %vm602, %v750
    %s754 = sld [smem:[#allocation6 + $0x1c]]
    %v755 = vstv %s754
    %v756 = vmul.f32 %v183, %v755
    %v757 = vmul.f32 %v184, %v755
    %s758 = sld [smem:[#allocation6 + $0x1d]]
    %v759 = vstv %s758
    %v760 = vmul.f32 %v314, %v759
    %v761 = vmul.f32 %v315, %v759
    %v762 = vadd.f32 %v756, %v760
    %v763 = vadd.f32 %v757, %v761
    %s764 = sld [smem:[#allocation6 + $0x1e]]
    %v765 = vstv %s764
    %v766 = vmul.f32 %v445, %v765
    %v767 = vmul.f32 %v446, %v765
    %v768 = vadd.f32 %v762, %v766
    %v769 = vadd.f32 %v763, %v767
    %s770 = sld [smem:[#allocation6 + $0x1f]]
    %v771 = vstv %s770
    %v772 = vmul.f32 %v576, %v771
    %v773 = vmul.f32 %v577, %v771
    %v774 = vadd.f32 %v768, %v772
    %v775 = vadd.f32 %v769, %v773
    %s776 = scalar_lea.vmem %s3, 112
    %777 = vst.msk [vmem:[%s776] sm:$0xff] %vm600, %v774
    %778 = vst.msk [vmem:[%s776 + $0x8] sm:$0x3f] %vm602, %v775
    %s779 = scalar_lea.vmem [#allocation2], 64
    %v780 = vld [vmem:[%s779] sm:$0xff]
    %v781 = vld [vmem:[%s779 + $0x8] sm:$0xff]
    %s782 = sld [smem:[#allocation5]]
    %v783 = vstv %s782
    %v784 = vmul.f32 %v780, %v783
    %v785 = vmul.f32 %v781, %v783
    %v786 = vadd.f32 %v784, 0.0
    %v787 = vadd.f32 %v785, 0.0
    %s788 = sld [smem:[#allocation5 + $0x1]]
    %v789 = vstv %s788
    %v790 = vmul.f32 %v780, %v789
    %v791 = vmul.f32 %v781, %v789
    %794 = vrot.lane.b32.xlu0 %v790, 127
    %v795 = vpop.permute.xlu0 %794
    %796 = vrot.lane.b32.xlu0 %v791, 127
    %v797 = vpop.permute.xlu0 %796
    %v800 = vadd.f32 %v786, %v795
    %v801 = vadd.f32 %v787, %v797
    %s802 = sld [smem:[#allocation5 + $0x2]]
    %v803 = vstv %s802
    %v804 = vmul.f32 %v780, %v803
    %v805 = vmul.f32 %v781, %v803
    %808 = vrot.lane.b32.xlu0 %v804, 126
    %v809 = vpop.permute.xlu0 %808
    %810 = vrot.lane.b32.xlu0 %v805, 126
    %v811 = vpop.permute.xlu0 %810
    %v814 = vadd.f32 %v800, %v809
    %v815 = vadd.f32 %v801, %v811
    %s816 = sld [smem:[#allocation5 + $0x3]]
    %v817 = vstv %s816
    %v818 = vmul.f32 %v780, %v817
    %v819 = vmul.f32 %v781, %v817
    %v822 = vrot.slane %v818, 1
    %v823 = vrot.slane %v819, 1
    %v824 = vsel %vm95, %v822, %v823
    %v827 = vadd.f32 %v814, %v824
    %v828 = vadd.f32 %v815, %v823
    %s829 = sld [smem:[#allocation5 + $0x4]]
    %v830 = vstv %s829
    %v831 = vmul.f32 %v780, %v830
    %v832 = vmul.f32 %v781, %v830
    %v835 = vrot.slane %v831, 1
    %v836 = vrot.slane %v832, 1
    %v837 = vsel %vm95, %v835, %v836
    %838 = vrot.lane.b32.xlu0 %v837, 127
    %v839 = vpop.permute.xlu0 %838
    %840 = vrot.lane.b32.xlu0 %v836, 127
    %v841 = vpop.permute.xlu0 %840
    %v844 = vadd.f32 %v827, %v839
    %v845 = vadd.f32 %v828, %v841
    %s846 = sld [smem:[#allocation5 + $0x5]]
    %v847 = vstv %s846
    %v848 = vmul.f32 %v780, %v847
    %v849 = vmul.f32 %v781, %v847
    %v852 = vrot.slane %v848, 1
    %v853 = vrot.slane %v849, 1
    %v854 = vsel %vm95, %v852, %v853
    %855 = vrot.lane.b32.xlu0 %v854, 126
    %v856 = vpop.permute.xlu0 %855
    %857 = vrot.lane.b32.xlu0 %v853, 126
    %v858 = vpop.permute.xlu0 %857
    %v861 = vadd.f32 %v844, %v856
    %v862 = vadd.f32 %v845, %v858
    %s863 = sld [smem:[#allocation5 + $0x6]]
    %v864 = vstv %s863
    %v865 = vmul.f32 %v780, %v864
    %v866 = vmul.f32 %v781, %v864
    %v869 = vrot.slane %v865, 2
    %v870 = vrot.slane %v866, 2
    %v871 = vsel %vm143, %v869, %v870
    %v874 = vadd.f32 %v861, %v871
    %v875 = vadd.f32 %v862, %v870
    %s876 = sld [smem:[#allocation5 + $0x7]]
    %v877 = vstv %s876
    %v878 = vmul.f32 %v780, %v877
    %v879 = vmul.f32 %v781, %v877
    %v882 = vrot.slane %v878, 2
    %v883 = vrot.slane %v879, 2
    %v884 = vsel %vm143, %v882, %v883
    %885 = vrot.lane.b32.xlu0 %v884, 127
    %v886 = vpop.permute.xlu0 %885
    %887 = vrot.lane.b32.xlu0 %v883, 127
    %v888 = vpop.permute.xlu0 %887
    %v891 = vadd.f32 %v874, %v886
    %v892 = vadd.f32 %v875, %v888
    %s893 = sld [smem:[#allocation5 + $0x8]]
    %v894 = vstv %s893
    %v895 = vmul.f32 %v780, %v894
    %v896 = vmul.f32 %v781, %v894
    %v899 = vrot.slane %v895, 2
    %v900 = vrot.slane %v896, 2
    %v901 = vsel %vm143, %v899, %v900
    %902 = vrot.lane.b32.xlu0 %v901, 126
    %v903 = vpop.permute.xlu0 %902
    %904 = vrot.lane.b32.xlu0 %v900, 126
    %v905 = vpop.permute.xlu0 %904
    %v908 = vadd.f32 %v891, %v903
    %v909 = vadd.f32 %v892, %v905
    %s910 = scalar_lea.vmem [#allocation2], 80
    %v911 = vld [vmem:[%s910] sm:$0xff]
    %v912 = vld [vmem:[%s910 + $0x8] sm:$0xff]
    %s913 = sld [smem:[#allocation5 + $0x9]]
    %v914 = vstv %s913
    %v915 = vmul.f32 %v911, %v914
    %v916 = vmul.f32 %v912, %v914
    %v917 = vadd.f32 %v915, 0.0
    %v918 = vadd.f32 %v916, 0.0
    %s919 = sld [smem:[#allocation5 + $0xa]]
    %v920 = vstv %s919
    %v921 = vmul.f32 %v911, %v920
    %v922 = vmul.f32 %v912, %v920
    %925 = vrot.lane.b32.xlu0 %v921, 127
    %v926 = vpop.permute.xlu0 %925
    %927 = vrot.lane.b32.xlu0 %v922, 127
    %v928 = vpop.permute.xlu0 %927
    %v931 = vadd.f32 %v917, %v926
    %v932 = vadd.f32 %v918, %v928
    %s933 = sld [smem:[#allocation5 + $0xb]]
    %v934 = vstv %s933
    %v935 = vmul.f32 %v911, %v934
    %v936 = vmul.f32 %v912, %v934
    %939 = vrot.lane.b32.xlu0 %v935, 126
    %v940 = vpop.permute.xlu0 %939
    %941 = vrot.lane.b32.xlu0 %v936, 126
    %v942 = vpop.permute.xlu0 %941
    %v945 = vadd.f32 %v931, %v940
    %v946 = vadd.f32 %v932, %v942
    %s947 = sld [smem:[#allocation5 + $0xc]]
    %v948 = vstv %s947
    %v949 = vmul.f32 %v911, %v948
    %v950 = vmul.f32 %v912, %v948
    %v953 = vrot.slane %v949, 1
    %v954 = vrot.slane %v950, 1
    %v955 = vsel %vm95, %v953, %v954
    %v958 = vadd.f32 %v945, %v955
    %v959 = vadd.f32 %v946, %v954
    %s960 = sld [smem:[#allocation5 + $0xd]]
    %v961 = vstv %s960
    %v962 = vmul.f32 %v911, %v961
    %v963 = vmul.f32 %v912, %v961
    %v966 = vrot.slane %v962, 1
    %v967 = vrot.slane %v963, 1
    %v968 = vsel %vm95, %v966, %v967
    %969 = vrot.lane.b32.xlu0 %v968, 127
    %v970 = vpop.permute.xlu0 %969
    %971 = vrot.lane.b32.xlu0 %v967, 127
    %v972 = vpop.permute.xlu0 %971
    %v975 = vadd.f32 %v958, %v970
    %v976 = vadd.f32 %v959, %v972
    %s977 = sld [smem:[#allocation5 + $0xe]]
    %v978 = vstv %s977
    %v979 = vmul.f32 %v911, %v978
    %v980 = vmul.f32 %v912, %v978
    %v983 = vrot.slane %v979, 1
    %v984 = vrot.slane %v980, 1
    %v985 = vsel %vm95, %v983, %v984
    %986 = vrot.lane.b32.xlu0 %v985, 126
    %v987 = vpop.permute.xlu0 %986
    %988 = vrot.lane.b32.xlu0 %v984, 126
    %v989 = vpop.permute.xlu0 %988
    %v992 = vadd.f32 %v975, %v987
    %v993 = vadd.f32 %v976, %v989
    %s994 = sld [smem:[#allocation5 + $0xf]]
    %v995 = vstv %s994
    %v996 = vmul.f32 %v911, %v995
    %v997 = vmul.f32 %v912, %v995
    %v1000 = vrot.slane %v996, 2
    %v1001 = vrot.slane %v997, 2
    %v1002 = vsel %vm143, %v1000, %v1001
    %v1005 = vadd.f32 %v992, %v1002
    %v1006 = vadd.f32 %v993, %v1001
    %s1007 = sld [smem:[#allocation5 + $0x10]]
    %v1008 = vstv %s1007
    %v1009 = vmul.f32 %v911, %v1008
    %v1010 = vmul.f32 %v912, %v1008
    %v1013 = vrot.slane %v1009, 2
    %v1014 = vrot.slane %v1010, 2
    %v1015 = vsel %vm143, %v1013, %v1014
    %1016 = vrot.lane.b32.xlu0 %v1015, 127
    %v1017 = vpop.permute.xlu0 %1016
    %1018 = vrot.lane.b32.xlu0 %v1014, 127
    %v1019 = vpop.permute.xlu0 %1018
    %v1022 = vadd.f32 %v1005, %v1017
    %v1023 = vadd.f32 %v1006, %v1019
    %s1024 = sld [smem:[#allocation5 + $0x11]]
    %v1025 = vstv %s1024
    %v1026 = vmul.f32 %v911, %v1025
    %v1027 = vmul.f32 %v912, %v1025
    %v1030 = vrot.slane %v1026, 2
    %v1031 = vrot.slane %v1027, 2
    %v1032 = vsel %vm143, %v1030, %v1031
    %1033 = vrot.lane.b32.xlu0 %v1032, 126
    %v1034 = vpop.permute.xlu0 %1033
    %1035 = vrot.lane.b32.xlu0 %v1031, 126
    %v1036 = vpop.permute.xlu0 %1035
    %v1039 = vadd.f32 %v1022, %v1034
    %v1040 = vadd.f32 %v1023, %v1036
    %s1041 = scalar_lea.vmem [#allocation2], 96
    %v1042 = vld [vmem:[%s1041] sm:$0xff]
    %v1043 = vld [vmem:[%s1041 + $0x8] sm:$0xff]
    %s1044 = sld [smem:[#allocation5 + $0x12]]
    %v1045 = vstv %s1044
    %v1046 = vmul.f32 %v1042, %v1045
    %v1047 = vmul.f32 %v1043, %v1045
    %v1048 = vadd.f32 %v1046, 0.0
    %v1049 = vadd.f32 %v1047, 0.0
    %s1050 = sld [smem:[#allocation5 + $0x13]]
    %v1051 = vstv %s1050
    %v1052 = vmul.f32 %v1042, %v1051
    %v1053 = vmul.f32 %v1043, %v1051
    %1056 = vrot.lane.b32.xlu0 %v1052, 127
    %v1057 = vpop.permute.xlu0 %1056
    %1058 = vrot.lane.b32.xlu0 %v1053, 127
    %v1059 = vpop.permute.xlu0 %1058
    %v1062 = vadd.f32 %v1048, %v1057
    %v1063 = vadd.f32 %v1049, %v1059
    %s1064 = sld [smem:[#allocation5 + $0x14]]
    %v1065 = vstv %s1064
    %v1066 = vmul.f32 %v1042, %v1065
    %v1067 = vmul.f32 %v1043, %v1065
    %1070 = vrot.lane.b32.xlu0 %v1066, 126
    %v1071 = vpop.permute.xlu0 %1070
    %1072 = vrot.lane.b32.xlu0 %v1067, 126
    %v1073 = vpop.permute.xlu0 %1072
    %v1076 = vadd.f32 %v1062, %v1071
    %v1077 = vadd.f32 %v1063, %v1073
    %s1078 = sld [smem:[#allocation5 + $0x15]]
    %v1079 = vstv %s1078
    %v1080 = vmul.f32 %v1042, %v1079
    %v1081 = vmul.f32 %v1043, %v1079
    %v1084 = vrot.slane %v1080, 1
    %v1085 = vrot.slane %v1081, 1
    %v1086 = vsel %vm95, %v1084, %v1085
    %v1089 = vadd.f32 %v1076, %v1086
    %v1090 = vadd.f32 %v1077, %v1085
    %s1091 = sld [smem:[#allocation5 + $0x16]]
    %v1092 = vstv %s1091
    %v1093 = vmul.f32 %v1042, %v1092
    %v1094 = vmul.f32 %v1043, %v1092
    %v1097 = vrot.slane %v1093, 1
    %v1098 = vrot.slane %v1094, 1
    %v1099 = vsel %vm95, %v1097, %v1098
    %1100 = vrot.lane.b32.xlu0 %v1099, 127
    %v1101 = vpop.permute.xlu0 %1100
    %1102 = vrot.lane.b32.xlu0 %v1098, 127
    %v1103 = vpop.permute.xlu0 %1102
    %v1106 = vadd.f32 %v1089, %v1101
    %v1107 = vadd.f32 %v1090, %v1103
    %s1108 = sld [smem:[#allocation5 + $0x17]]
    %v1109 = vstv %s1108
    %v1110 = vmul.f32 %v1042, %v1109
    %v1111 = vmul.f32 %v1043, %v1109
    %v1114 = vrot.slane %v1110, 1
    %v1115 = vrot.slane %v1111, 1
    %v1116 = vsel %vm95, %v1114, %v1115
    %1117 = vrot.lane.b32.xlu0 %v1116, 126
    %v1118 = vpop.permute.xlu0 %1117
    %1119 = vrot.lane.b32.xlu0 %v1115, 126
    %v1120 = vpop.permute.xlu0 %1119
    %v1123 = vadd.f32 %v1106, %v1118
    %v1124 = vadd.f32 %v1107, %v1120
    %s1125 = sld [smem:[#allocation5 + $0x18]]
    %v1126 = vstv %s1125
    %v1127 = vmul.f32 %v1042, %v1126
    %v1128 = vmul.f32 %v1043, %v1126
    %v1131 = vrot.slane %v1127, 2
    %v1132 = vrot.slane %v1128, 2
    %v1133 = vsel %vm143, %v1131, %v1132
    %v1136 = vadd.f32 %v1123, %v1133
    %v1137 = vadd.f32 %v1124, %v1132
    %s1138 = sld [smem:[#allocation5 + $0x19]]
    %v1139 = vstv %s1138
    %v1140 = vmul.f32 %v1042, %v1139
    %v1141 = vmul.f32 %v1043, %v1139
    %v1144 = vrot.slane %v1140, 2
    %v1145 = vrot.slane %v1141, 2
    %v1146 = vsel %vm143, %v1144, %v1145
    %1147 = vrot.lane.b32.xlu0 %v1146, 127
    %v1148 = vpop.permute.xlu0 %1147
    %1149 = vrot.lane.b32.xlu0 %v1145, 127
    %v1150 = vpop.permute.xlu0 %1149
    %v1153 = vadd.f32 %v1136, %v1148
    %v1154 = vadd.f32 %v1137, %v1150
    %s1155 = sld [smem:[#allocation5 + $0x1a]]
    %v1156 = vstv %s1155
    %v1157 = vmul.f32 %v1042, %v1156
    %v1158 = vmul.f32 %v1043, %v1156
    %v1161 = vrot.slane %v1157, 2
    %v1162 = vrot.slane %v1158, 2
    %v1163 = vsel %vm143, %v1161, %v1162
    %1164 = vrot.lane.b32.xlu0 %v1163, 126
    %v1165 = vpop.permute.xlu0 %1164
    %1166 = vrot.lane.b32.xlu0 %v1162, 126
    %v1167 = vpop.permute.xlu0 %1166
    %v1170 = vadd.f32 %v1153, %v1165
    %v1171 = vadd.f32 %v1154, %v1167
    %s1172 = scalar_lea.vmem [#allocation2], 112
    %v1173 = vld [vmem:[%s1172] sm:$0xff]
    %v1174 = vld [vmem:[%s1172 + $0x8] sm:$0xff]
    %s1175 = sld [smem:[#allocation5 + $0x1b]]
    %v1176 = vstv %s1175
    %v1177 = vmul.f32 %v1173, %v1176
    %v1178 = vmul.f32 %v1174, %v1176
    %v1179 = vadd.f32 %v1177, 0.0
    %v1180 = vadd.f32 %v1178, 0.0
    %s1181 = sld [smem:[#allocation5 + $0x1c]]
    %v1182 = vstv %s1181
    %v1183 = vmul.f32 %v1173, %v1182
    %v1184 = vmul.f32 %v1174, %v1182
    %1187 = vrot.lane.b32.xlu0 %v1183, 127
    %v1188 = vpop.permute.xlu0 %1187
    %1189 = vrot.lane.b32.xlu0 %v1184, 127
    %v1190 = vpop.permute.xlu0 %1189
    %v1193 = vadd.f32 %v1179, %v1188
    %v1194 = vadd.f32 %v1180, %v1190
    %s1195 = sld [smem:[#allocation5 + $0x1d]]
    %v1196 = vstv %s1195
    %v1197 = vmul.f32 %v1173, %v1196
    %v1198 = vmul.f32 %v1174, %v1196
    %1201 = vrot.lane.b32.xlu0 %v1197, 126
    %v1202 = vpop.permute.xlu0 %1201
    %1203 = vrot.lane.b32.xlu0 %v1198, 126
    %v1204 = vpop.permute.xlu0 %1203
    %v1207 = vadd.f32 %v1193, %v1202
    %v1208 = vadd.f32 %v1194, %v1204
    %s1209 = sld [smem:[#allocation5 + $0x1e]]
    %v1210 = vstv %s1209
    %v1211 = vmul.f32 %v1173, %v1210
    %v1212 = vmul.f32 %v1174, %v1210
    %v1215 = vrot.slane %v1211, 1
    %v1216 = vrot.slane %v1212, 1
    %v1217 = vsel %vm95, %v1215, %v1216
    %v1220 = vadd.f32 %v1207, %v1217
    %v1221 = vadd.f32 %v1208, %v1216
    %s1222 = sld [smem:[#allocation5 + $0x1f]]
    %v1223 = vstv %s1222
    %v1224 = vmul.f32 %v1173, %v1223
    %v1225 = vmul.f32 %v1174, %v1223
    %v1228 = vrot.slane %v1224, 1
    %v1229 = vrot.slane %v1225, 1
    %v1230 = vsel %vm95, %v1228, %v1229
    %1231 = vrot.lane.b32.xlu0 %v1230, 127
    %v1232 = vpop.permute.xlu0 %1231
    %1233 = vrot.lane.b32.xlu0 %v1229, 127
    %v1234 = vpop.permute.xlu0 %1233
    %v1237 = vadd.f32 %v1220, %v1232
    %v1238 = vadd.f32 %v1221, %v1234
    %s1239 = sld [smem:[#allocation5 + $0x20]]
    %v1240 = vstv %s1239
    %v1241 = vmul.f32 %v1173, %v1240
    %v1242 = vmul.f32 %v1174, %v1240
    %v1245 = vrot.slane %v1241, 1
    %v1246 = vrot.slane %v1242, 1
    %v1247 = vsel %vm95, %v1245, %v1246
    %1248 = vrot.lane.b32.xlu0 %v1247, 126
    %v1249 = vpop.permute.xlu0 %1248
    %1250 = vrot.lane.b32.xlu0 %v1246, 126
    %v1251 = vpop.permute.xlu0 %1250
    %v1254 = vadd.f32 %v1237, %v1249
    %v1255 = vadd.f32 %v1238, %v1251
    %s1256 = sld [smem:[#allocation5 + $0x21]]
    %v1257 = vstv %s1256
    %v1258 = vmul.f32 %v1173, %v1257
    %v1259 = vmul.f32 %v1174, %v1257
    %v1262 = vrot.slane %v1258, 2
    %v1263 = vrot.slane %v1259, 2
    %v1264 = vsel %vm143, %v1262, %v1263
    %v1267 = vadd.f32 %v1254, %v1264
    %v1268 = vadd.f32 %v1255, %v1263
    %s1269 = sld [smem:[#allocation5 + $0x22]]
    %v1270 = vstv %s1269
    %v1271 = vmul.f32 %v1173, %v1270
    %v1272 = vmul.f32 %v1174, %v1270
    %v1275 = vrot.slane %v1271, 2
    %v1276 = vrot.slane %v1272, 2
    %v1277 = vsel %vm143, %v1275, %v1276
    %1278 = vrot.lane.b32.xlu0 %v1277, 127
    %v1279 = vpop.permute.xlu0 %1278
    %1280 = vrot.lane.b32.xlu0 %v1276, 127
    %v1281 = vpop.permute.xlu0 %1280
    %v1284 = vadd.f32 %v1267, %v1279
    %v1285 = vadd.f32 %v1268, %v1281
    %s1286 = sld [smem:[#allocation5 + $0x23]]
    %v1287 = vstv %s1286
    %v1288 = vmul.f32 %v1173, %v1287
    %v1289 = vmul.f32 %v1174, %v1287
    %v1292 = vrot.slane %v1288, 2
    %v1293 = vrot.slane %v1289, 2
    %v1294 = vsel %vm143, %v1292, %v1293
    %1295 = vrot.lane.b32.xlu0 %v1294, 126
    %v1296 = vpop.permute.xlu0 %1295
    %1297 = vrot.lane.b32.xlu0 %v1293, 126
    %v1298 = vpop.permute.xlu0 %1297
    %v1301 = vadd.f32 %v1284, %v1296
    %v1302 = vadd.f32 %v1285, %v1298
    %s1303 = sld [smem:[#allocation6]]
    %v1304 = vstv %s1303
    %v1305 = vmul.f32 %v908, %v1304
    %v1306 = vmul.f32 %v909, %v1304
    %s1307 = sld [smem:[#allocation6 + $0x1]]
    %v1308 = vstv %s1307
    %v1309 = vmul.f32 %v1039, %v1308
    %v1310 = vmul.f32 %v1040, %v1308
    %v1311 = vadd.f32 %v1305, %v1309
    %v1312 = vadd.f32 %v1306, %v1310
    %s1313 = sld [smem:[#allocation6 + $0x2]]
    %v1314 = vstv %s1313
    %v1315 = vmul.f32 %v1170, %v1314
    %v1316 = vmul.f32 %v1171, %v1314
    %v1317 = vadd.f32 %v1311, %v1315
    %v1318 = vadd.f32 %v1312, %v1316
    %s1319 = sld [smem:[#allocation6 + $0x3]]
    %v1320 = vstv %s1319
    %v1321 = vmul.f32 %v1301, %v1320
    %v1322 = vmul.f32 %v1302, %v1320
    %v1323 = vadd.f32 %v1317, %v1321
    %v1324 = vadd.f32 %v1318, %v1322
    %s1325 = scalar_lea.vmem %s3, 128
    %1326 = vst.msk [vmem:[%s1325] sm:$0xff] %vm600, %v1323
    %1327 = vst.msk [vmem:[%s1325 + $0x8] sm:$0x3f] %vm602, %v1324
    %s1328 = sld [smem:[#allocation6 + $0x4]]
    %v1329 = vstv %s1328
    %v1330 = vmul.f32 %v908, %v1329
    %v1331 = vmul.f32 %v909, %v1329
    %s1332 = sld [smem:[#allocation6 + $0x5]]
    %v1333 = vstv %s1332
    %v1334 = vmul.f32 %v1039, %v1333
    %v1335 = vmul.f32 %v1040, %v1333
    %v1336 = vadd.f32 %v1330, %v1334
    %v1337 = vadd.f32 %v1331, %v1335
    %s1338 = sld [smem:[#allocation6 + $0x6]]
    %v1339 = vstv %s1338
    %v1340 = vmul.f32 %v1170, %v1339
    %v1341 = vmul.f32 %v1171, %v1339
    %v1342 = vadd.f32 %v1336, %v1340
    %v1343 = vadd.f32 %v1337, %v1341
    %s1344 = sld [smem:[#allocation6 + $0x7]]
    %v1345 = vstv %s1344
    %v1346 = vmul.f32 %v1301, %v1345
    %v1347 = vmul.f32 %v1302, %v1345
    %v1348 = vadd.f32 %v1342, %v1346
    %v1349 = vadd.f32 %v1343, %v1347
    %s1350 = scalar_lea.vmem %s3, 144
    %1351 = vst.msk [vmem:[%s1350] sm:$0xff] %vm600, %v1348
    %1352 = vst.msk [vmem:[%s1350 + $0x8] sm:$0x3f] %vm602, %v1349
    %s1353 = sld [smem:[#allocation6 + $0x8]]
    %v1354 = vstv %s1353
    %v1355 = vmul.f32 %v908, %v1354
    %v1356 = vmul.f32 %v909, %v1354
    %s1357 = sld [smem:[#allocation6 + $0x9]]
    %v1358 = vstv %s1357
    %v1359 = vmul.f32 %v1039, %v1358
    %v1360 = vmul.f32 %v1040, %v1358
    %v1361 = vadd.f32 %v1355, %v1359
    %v1362 = vadd.f32 %v1356, %v1360
    %s1363 = sld [smem:[#allocation6 + $0xa]]
    %v1364 = vstv %s1363
    %v1365 = vmul.f32 %v1170, %v1364
    %v1366 = vmul.f32 %v1171, %v1364
    %v1367 = vadd.f32 %v1361, %v1365
    %v1368 = vadd.f32 %v1362, %v1366
    %s1369 = sld [smem:[#allocation6 + $0xb]]
    %v1370 = vstv %s1369
    %v1371 = vmul.f32 %v1301, %v1370
    %v1372 = vmul.f32 %v1302, %v1370
    %v1373 = vadd.f32 %v1367, %v1371
    %v1374 = vadd.f32 %v1368, %v1372
    %s1375 = scalar_lea.vmem %s3, 160
    %1376 = vst.msk [vmem:[%s1375] sm:$0xff] %vm600, %v1373
    %1377 = vst.msk [vmem:[%s1375 + $0x8] sm:$0x3f] %vm602, %v1374
    %s1378 = sld [smem:[#allocation6 + $0xc]]
    %v1379 = vstv %s1378
    %v1380 = vmul.f32 %v908, %v1379
    %v1381 = vmul.f32 %v909, %v1379
    %s1382 = sld [smem:[#allocation6 + $0xd]]
    %v1383 = vstv %s1382
    %v1384 = vmul.f32 %v1039, %v1383
    %v1385 = vmul.f32 %v1040, %v1383
    %v1386 = vadd.f32 %v1380, %v1384
    %v1387 = vadd.f32 %v1381, %v1385
    %s1388 = sld [smem:[#allocation6 + $0xe]]
    %v1389 = vstv %s1388
    %v1390 = vmul.f32 %v1170, %v1389
    %v1391 = vmul.f32 %v1171, %v1389
    %v1392 = vadd.f32 %v1386, %v1390
    %v1393 = vadd.f32 %v1387, %v1391
    %s1394 = sld [smem:[#allocation6 + $0xf]]
    %v1395 = vstv %s1394
    %v1396 = vmul.f32 %v1301, %v1395
    %v1397 = vmul.f32 %v1302, %v1395
    %v1398 = vadd.f32 %v1392, %v1396
    %v1399 = vadd.f32 %v1393, %v1397
    %s1400 = scalar_lea.vmem %s3, 176
    %1401 = vst.msk [vmem:[%s1400] sm:$0xff] %vm600, %v1398
    %1402 = vst.msk [vmem:[%s1400 + $0x8] sm:$0x3f] %vm602, %v1399
    %s1403 = sld [smem:[#allocation6 + $0x10]]
    %v1404 = vstv %s1403
    %v1405 = vmul.f32 %v908, %v1404
    %v1406 = vmul.f32 %v909, %v1404
    %s1407 = sld [smem:[#allocation6 + $0x11]]
    %v1408 = vstv %s1407
    %v1409 = vmul.f32 %v1039, %v1408
    %v1410 = vmul.f32 %v1040, %v1408
    %v1411 = vadd.f32 %v1405, %v1409
    %v1412 = vadd.f32 %v1406, %v1410
    %s1413 = sld [smem:[#allocation6 + $0x12]]
    %v1414 = vstv %s1413
    %v1415 = vmul.f32 %v1170, %v1414
    %v1416 = vmul.f32 %v1171, %v1414
    %v1417 = vadd.f32 %v1411, %v1415
    %v1418 = vadd.f32 %v1412, %v1416
    %s1419 = sld [smem:[#allocation6 + $0x13]]
    %v1420 = vstv %s1419
    %v1421 = vmul.f32 %v1301, %v1420
    %v1422 = vmul.f32 %v1302, %v1420
    %v1423 = vadd.f32 %v1417, %v1421
    %v1424 = vadd.f32 %v1418, %v1422
    %s1425 = scalar_lea.vmem %s3, 192
    %1426 = vst.msk [vmem:[%s1425] sm:$0xff] %vm600, %v1423
    %1427 = vst.msk [vmem:[%s1425 + $0x8] sm:$0x3f] %vm602, %v1424
    %s1428 = sld [smem:[#allocation6 + $0x14]]
    %v1429 = vstv %s1428
    %v1430 = vmul.f32 %v908, %v1429
    %v1431 = vmul.f32 %v909, %v1429
    %s1432 = sld [smem:[#allocation6 + $0x15]]
    %v1433 = vstv %s1432
    %v1434 = vmul.f32 %v1039, %v1433
    %v1435 = vmul.f32 %v1040, %v1433
    %v1436 = vadd.f32 %v1430, %v1434
    %v1437 = vadd.f32 %v1431, %v1435
    %s1438 = sld [smem:[#allocation6 + $0x16]]
    %v1439 = vstv %s1438
    %v1440 = vmul.f32 %v1170, %v1439
    %v1441 = vmul.f32 %v1171, %v1439
    %v1442 = vadd.f32 %v1436, %v1440
    %v1443 = vadd.f32 %v1437, %v1441
    %s1444 = sld [smem:[#allocation6 + $0x17]]
    %v1445 = vstv %s1444
    %v1446 = vmul.f32 %v1301, %v1445
    %v1447 = vmul.f32 %v1302, %v1445
    %v1448 = vadd.f32 %v1442, %v1446
    %v1449 = vadd.f32 %v1443, %v1447
    %s1450 = scalar_lea.vmem %s3, 208
    %1451 = vst.msk [vmem:[%s1450] sm:$0xff] %vm600, %v1448
    %1452 = vst.msk [vmem:[%s1450 + $0x8] sm:$0x3f] %vm602, %v1449
    %s1453 = sld [smem:[#allocation6 + $0x18]]
    %v1454 = vstv %s1453
    %v1455 = vmul.f32 %v908, %v1454
    %v1456 = vmul.f32 %v909, %v1454
    %s1457 = sld [smem:[#allocation6 + $0x19]]
    %v1458 = vstv %s1457
    %v1459 = vmul.f32 %v1039, %v1458
    %v1460 = vmul.f32 %v1040, %v1458
    %v1461 = vadd.f32 %v1455, %v1459
    %v1462 = vadd.f32 %v1456, %v1460
    %s1463 = sld [smem:[#allocation6 + $0x1a]]
    %v1464 = vstv %s1463
    %v1465 = vmul.f32 %v1170, %v1464
    %v1466 = vmul.f32 %v1171, %v1464
    %v1467 = vadd.f32 %v1461, %v1465
    %v1468 = vadd.f32 %v1462, %v1466
    %s1469 = sld [smem:[#allocation6 + $0x1b]]
    %v1470 = vstv %s1469
    %v1471 = vmul.f32 %v1301, %v1470
    %v1472 = vmul.f32 %v1302, %v1470
    %v1473 = vadd.f32 %v1467, %v1471
    %v1474 = vadd.f32 %v1468, %v1472
    %s1475 = scalar_lea.vmem %s3, 224
    %1476 = vst.msk [vmem:[%s1475] sm:$0xff] %vm600, %v1473
    %1477 = vst.msk [vmem:[%s1475 + $0x8] sm:$0x3f] %vm602, %v1474
    %s1478 = sld [smem:[#allocation6 + $0x1c]]
    %v1479 = vstv %s1478
    %v1480 = vmul.f32 %v908, %v1479
    %v1481 = vmul.f32 %v909, %v1479
    %s1482 = sld [smem:[#allocation6 + $0x1d]]
    %v1483 = vstv %s1482
    %v1484 = vmul.f32 %v1039, %v1483
    %v1485 = vmul.f32 %v1040, %v1483
    %v1486 = vadd.f32 %v1480, %v1484
    %v1487 = vadd.f32 %v1481, %v1485
    %s1488 = sld [smem:[#allocation6 + $0x1e]]
    %v1489 = vstv %s1488
    %v1490 = vmul.f32 %v1170, %v1489
    %v1491 = vmul.f32 %v1171, %v1489
    %v1492 = vadd.f32 %v1486, %v1490
    %v1493 = vadd.f32 %v1487, %v1491
    %s1494 = sld [smem:[#allocation6 + $0x1f]]
    %v1495 = vstv %s1494
    %v1496 = vmul.f32 %v1301, %v1495
    %v1497 = vmul.f32 %v1302, %v1495
    %v1498 = vadd.f32 %v1492, %v1496
    %v1499 = vadd.f32 %v1493, %v1497
    %s1500 = scalar_lea.vmem %s3, 240
    %1501 = vst.msk [vmem:[%s1500] sm:$0xff] %vm600, %v1498
    %1502 = vst.msk [vmem:[%s1500 + $0x8] sm:$0x3f] %vm602, %v1499
    // Predicated region
    $region26: #{tpu_custom_call.1} parent=1 // pred_check
      _
    $region27: #{tpu_custom_call.1} parent=1 // pred_check_branch
      %1504 = sbr.rel (0) target = $region29
    $region28: #{tpu_custom_call.1} parent=1 // pred_region
      _
    $region29: #{tpu_custom_call.1} parent=1 // pred_fallthru
      _
    // Predicated region
    $region30: #{tpu_custom_call.1} parent=1 // pred_check
      _
    $region31: #{tpu_custom_call.1} parent=1 // pred_check_branch
      %1506 = sbr.rel (0) target = $region33
    $region32: #{tpu_custom_call.1} parent=1 // pred_region
      _
    $region33: #{tpu_custom_call.1} parent=1 // pred_fallthru
      _
    %1507 = vsyncpa [#allocation3], 1
    %1508 = vsyncpa [#allocation4], 1
    %1509 = vsyncpa [#allocation7], 1

</llo_original>
